<compile_context>
chip_gen: v7x
topology: tpu7x:2x2x1
jax: 0.10.0
libtpu: 0.0.40
codegen_flags: <defaults>
</compile_context>

<pallas_src>
from functools import partial

import jax
import jax.numpy as jnp
from jax import lax
from jax.experimental import pallas as pl
from jax.experimental.pallas import tpu as pltpu

LANE = 128


def _round_up(n, m):
    return ((n + m - 1) // m) * m


# ----------------------------- Pallas kernel ------------------------------ #
def resblock_kernel(x_ref, w1_ref, b1_ref, w2_ref, b2_ref, w3_ref, wsc_ref,
                    bf_ref, o_ref, *, H, W, PAD):
    Bt, HW, Cin = x_ref.shape
    Ci = w1_ref.shape[1]
    Cout = w3_ref.shape[1]

    x3 = x_ref[...]                                    # (Bt, HW, Cin) bf16
    x2d = x3.reshape(Bt * HW, Cin)

    # --- conv1: 1x1x1 conv (frozen-BN folded into weights) + bias + ReLU ----
    h1 = jnp.dot(x2d, w1_ref[...], preferred_element_type=jnp.float32)
    h1 = jnp.maximum(h1 + b1_ref[...], 0.0)
    # bf16 immediately: the whole im2col below is built/stored in bf16.
    h1 = h1.astype(jnp.bfloat16).reshape(Bt, HW, Ci)

    # --- conv2: 1x3x3 conv (pad=1, stride=1) as ONE fused matmul ------------
    # Zero halo above/below the flattened frame -> the 9 taps are static
    # sublane slices (no rolls, no row masks); only the 2 column-boundary
    # masks (kx = -1 / +1) remain.
    zpad = jnp.zeros((Bt, PAD, Ci), jnp.bfloat16)
    h1p = jnp.concatenate([zpad, h1, zpad], axis=1)    # (Bt, HW + 2*PAD, Ci)
    colv = lax.broadcasted_iota(jnp.int32, (1, HW, 1), 1) % W
    left_ok = colv >= 1                                 # column c-1 exists
    right_ok = colv <= W - 2                            # column c+1 exists
    zero = jnp.zeros((), jnp.bfloat16)
    taps = []
    for ky in (-1, 0, 1):
        for kx in (-1, 0, 1):
            off = ky * W + kx
            sh = h1p[:, PAD + off:PAD + off + HW, :]    # static slice, bf16
            if kx == -1:
                sh = jnp.where(left_ok, sh, zero)
            elif kx == 1:
                sh = jnp.where(right_ok, sh, zero)
            taps.append(sh)
    # Each tap slab is Ci (multiple of 128) lanes wide -> vreg-aligned concat.
    cat2 = jnp.concatenate(taps, axis=-1).reshape(Bt * HW, 9 * Ci)
    h2 = jnp.dot(cat2, w2_ref[...], preferred_element_type=jnp.float32)
    h2 = jnp.maximum(h2 + b2_ref[...], 0.0).astype(jnp.bfloat16)

    # --- conv3 + shortcut: two accumulating matmuls (no [h2|x] concat) ------
    y = jnp.dot(h2, w3_ref[...], preferred_element_type=jnp.float32)
    y = y + jnp.dot(x2d, wsc_ref[...], preferred_element_type=jnp.float32)
    y = jnp.maximum(y + bf_ref[...], 0.0)               # residual add + ReLU
    o_ref[...] = y.reshape(Bt, HW, Cout).astype(o_ref.dtype)   # bf16 store


# ------------------------- block-size / VMEM sizing ------------------------ #
def _vmem_budget():
    try:
        phys = int(pltpu.get_tpu_info().vmem_capacity_bytes)
    except Exception:
        phys = 64 << 20                    # conservative: v7x physical VMEM
    limit = min((phys * 3) // 4, 100 << 20)
    return limit, (limit * 3) // 5         # (vmem_limit_bytes, working budget)


def _choose_frames_per_step(B, HW, Cin_p, Ci_p, Cout_p, budget):
    def footprint(bt):
        rows = bt * HW
        return (2 * rows * Cin_p * 2            # input block, double-buffered bf16
                + 2 * rows * Cout_p * 2         # output block, double-buffered bf16
                + 2 * rows * Ci_p * 2           # h1 + halo copy (bf16)
                + rows * 9 * Ci_p * 2           # im2col concat (bf16)
                + rows * (Ci_p + Cout_p) * 4    # f32 matmul accumulators
                + (Cin_p * Ci_p + 9 * Ci_p * Ci_p
                   + Ci_p * Cout_p + Cin_p * Cout_p) * 2)   # resident weights

    # >= 8 grid steps: real software pipelining on v5e/v6e and both v7x cores
    # get >= 4 steps each; ~512+ rows/step already reaches ~85% of HBM roofline
    # so we cap rows per step instead of maximizing the block.
    min_steps = min(8, B)
    best = 1
    for bt in range(1, B + 1):
        if B % bt or (B // bt) < min_steps:
            continue
        if bt * HW > 8192:
            continue
        if footprint(bt) > budget:
            continue
        best = max(best, bt)
    return best


# ------------------------------- wrapper ---------------------------------- #
def resblock_forward(x, params, *, frames_per_step=None):
    """x: (N, C_in, T, H, W) float32  ->  (N, C_out, T, H, W) float32."""
    w1, b1, w2, b2, w3, wsc, bf = (params[k] for k in
                                   ("w1", "b1", "w2", "b2", "w3", "wsc", "bf"))
    Cout = params["cout"]
    N, Cin, T, H, W = x.shape
    Cin_p, Ci_p = w1.shape
    Cout_p = w3.shape[1]
    B, HW = N * T, H * W
    PAD = _round_up(W + 1, 8)

    vmem_limit, vmem_budget = _vmem_budget()
    if frames_per_step is None:
        frames_per_step = _choose_frames_per_step(B, HW, Cin_p, Ci_p, Cout_p,
                                                  vmem_budget)
    assert B % frames_per_step == 0, (B, frames_per_step)
    Bt = frames_per_step
    G = B // Bt

    # NCDHW -> (B, H*W, C) channels-last bf16 frames, C zero-padded to 128 lanes
    xf = jnp.transpose(x, (0, 2, 3, 4, 1)).reshape(B, HW, Cin).astype(jnp.bfloat16)
    if Cin_p != Cin:
        xf = jnp.pad(xf, ((0, 0), (0, 0), (0, Cin_p - Cin)))

    xmap = lambda g: (g, 0, 0)
    wmap = lambda g: (0, 0)
    full2d = lambda a: pl.BlockSpec(a.shape, wmap)

    weight_bytes = (Cin_p * Ci_p + 9 * Ci_p * Ci_p
                    + Ci_p * Cout_p + Cin_p * Cout_p) * 2
    flops = 2 * B * HW * (Cin_p * Ci_p + 9 * Ci_p * Ci_p
                          + Ci_p * Cout_p + Cin_p * Cout_p)
    bytes_accessed = (B * HW * (Cin_p + Cout_p) * 2 + weight_bytes
                      + (2 * Ci_p + Cout_p) * 4)

    out = pl.pallas_call(
        partial(resblock_kernel, H=H, W=W, PAD=PAD),
        out_shape=jax.ShapeDtypeStruct((B, HW, Cout_p), jnp.bfloat16),
        grid=(G,),
        in_specs=[
            pl.BlockSpec((Bt, HW, Cin_p), xmap),
            full2d(w1), full2d(b1),
            full2d(w2), full2d(b2),
            full2d(w3), full2d(wsc), full2d(bf),
        ],
        out_specs=pl.BlockSpec((Bt, HW, Cout_p), xmap),
        compiler_params=pltpu.CompilerParams(
            dimension_semantics=("parallel",),
            vmem_limit_bytes=vmem_limit),
        cost_estimate=pl.CostEstimate(flops=flops, transcendentals=0,
                                      bytes_accessed=bytes_accessed),
    )(xf, w1, b1, w2, b2, w3, wsc, bf)

    # (B, H*W, Cout_p) bf16 -> (N, Cout, T, H, W); transpose happens in bf16.
    out = out[:, :, :Cout].reshape(N, T, H, W, Cout).transpose(0, 4, 1, 2, 3)
    return out.astype(jnp.float32)


# ------------------------- deterministic parameters ------------------------ #
def frozen_bn_fold(num_features, eps=1e-5):
    # FrozenBatchNorm3d with gamma=1, beta=0, running_mean=0, running_var=1
    gamma = jnp.ones((num_features,), jnp.float32)
    beta = jnp.zeros((num_features,), jnp.float32)
    rm = jnp.zeros((num_features,), jnp.float32)
    rv = jnp.ones((num_features,), jnp.float32)
    scale = gamma / jnp.sqrt(rv + eps)
    bias = beta - rm * scale
    return scale, bias


def init_params(key, Cin, Cinner, Cout):
    k1, k2, k3, k4 = jax.random.split(key, 4)

    def kaiming(k, shape):                    # shape = (O, I, kT, kH, kW)
        fan_in = shape[1] * shape[2] * shape[3] * shape[4]
        return jax.random.normal(k, shape, jnp.float32) * (2.0 / fan_in) ** 0.5

    w1_t = kaiming(k1, (Cinner, Cin, 1, 1, 1))      # conv1 (1,1,1)
    w2_t = kaiming(k2, (Cinner, Cinner, 1, 3, 3))   # conv2 (1,3,3)
    w3_t = kaiming(k3, (Cout, Cinner, 1, 1, 1))     # conv3 (1,1,1)
    wsc_t = kaiming(k4, (Cout, Cin, 1, 1, 1))       # shortcut (1,1,1)

    bn_params = (frozen_bn_fold(Cinner) + frozen_bn_fold(Cinner)
                 + frozen_bn_fold(Cout) + frozen_bn_fold(Cout))
    return (w1_t, w2_t, w3_t, wsc_t), bn_params


def pack_params(pt_weights, bn_params, lane=LANE):
    """Fold frozen-BN into the conv weights, go to matmul layout, pad to 128 lanes."""
    w1_t, w2_t, w3_t, wsc_t = pt_weights
    s1, b1, s2, b2, s3, b3, ssc, bsc = bn_params
    Ci, Cin = w1_t.shape[0], w1_t.shape[1]
    Cout = w3_t.shape[0]
    Cin_p, Ci_p, Cout_p = (_round_up(c, lane) for c in (Cin, Ci, Cout))

    w1 = jnp.zeros((Cin_p, Ci_p), jnp.float32).at[:Cin, :Ci].set(
        w1_t.reshape(Ci, Cin).T * s1[None, :])                         # (Cin_p, Ci_p)
    w2_taps = jnp.transpose(w2_t[:, :, 0], (2, 3, 1, 0)) * s2[None, None, None, :]
    w2 = (jnp.zeros((3, 3, Ci_p, Ci_p), jnp.float32)
          .at[:, :, :Ci, :Ci].set(w2_taps).reshape(9 * Ci_p, Ci_p))    # tap-major rows
    w3 = jnp.zeros((Ci_p, Cout_p), jnp.float32).at[:Ci, :Cout].set(
        w3_t.reshape(Cout, Ci).T * s3[None, :])
    wsc = jnp.zeros((Cin_p, Cout_p), jnp.float32).at[:Cin, :Cout].set(
        wsc_t.reshape(Cout, Cin).T * ssc[None, :])

    b1p = jnp.zeros((1, Ci_p), jnp.float32).at[0, :Ci].set(b1)
    b2p = jnp.zeros((1, Ci_p), jnp.float32).at[0, :Ci].set(b2)
    bfp = jnp.zeros((1, Cout_p), jnp.float32).at[0, :Cout].set(b3 + bsc)

    return dict(w1=w1.astype(jnp.bfloat16), b1=b1p,
                w2=w2.astype(jnp.bfloat16), b2=b2p,
                w3=w3.astype(jnp.bfloat16), wsc=wsc.astype(jnp.bfloat16),
                bf=bfp, cout=Cout)


# ------------------------- plain-JAX reference ----------------------------- #
def _conv3d(x, w, padding):
    return lax.conv_general_dilated(
        x, w, window_strides=(1, 1, 1), padding=padding,
        dimension_numbers=('NCDHW', 'OIDHW', 'NCDHW'),
        precision=lax.Precision.HIGHEST)


def resblock_ref(x, pt_weights, bn_params):
    w1_t, w2_t, w3_t, wsc_t = pt_weights
    s1, b1, s2, b2, s3, b3, ssc, bsc = bn_params

    def bn(y, s, b):
        return y * s.reshape(1, -1, 1, 1, 1) + b.reshape(1, -1, 1, 1, 1)

    h = _conv3d(x, w1_t, [(0, 0), (0, 0), (0, 0)])
    h = jax.nn.relu(bn(h, s1, b1))
    h = _conv3d(h, w2_t, [(0, 0), (1, 1), (1, 1)])
    h = jax.nn.relu(bn(h, s2, b2))
    h = _conv3d(h, w3_t, [(0, 0), (0, 0), (0, 0)])
    tr = bn(h, s3, b3)
    sc = bn(_conv3d(x, wsc_t, [(0, 0), (0, 0), (0, 0)]), ssc, bsc)
    return jax.nn.relu(tr + sc)


# --------------------------------- main ------------------------------------ #
if __name__ == "__main__":
    N, Cin, T, H, W = 2, 8, 4, 8, 8
    Cinner, Cout = 8, 16

    key = jax.random.PRNGKey(0)
    kx_, kp = jax.random.split(key)
    x = jax.random.normal(kx_, (N, Cin, T, H, W), jnp.float32)

    pt_weights, bn_params = init_params(kp, Cin, Cinner, Cout)
    params = pack_params(pt_weights, bn_params)

    out = jax.block_until_ready(resblock_forward(x, params))

    # sanity check against a pure-JAX f32 reference of the same module
    # (kernel runs bf16-in / f32-accumulate / bf16-out, hence loose tolerance)
    ref = resblock_ref(x, pt_weights, bn_params)

    assert out.shape == (N, Cout, T, H, W), out.shape
    assert jnp.allclose(out, ref, atol=5e-2, rtol=5e-2), \
        float(jnp.max(jnp.abs(out - ref)))

    print("KERNEL_OK")
</pallas_src>

<mosaic_0001>
module attributes {stable_mosaic.version = 11 : i64} {
  func.func @resblock_kernel(%arg0: i32, %arg1: memref<1x64x128xbf16, #tpu.memory_space<vmem>>, %arg2: memref<128x128xbf16, #tpu.memory_space<vmem>>, %arg3: memref<1x128xf32, #tpu.memory_space<vmem>>, %arg4: memref<1152x128xbf16, #tpu.memory_space<vmem>>, %arg5: memref<1x128xf32, #tpu.memory_space<vmem>>, %arg6: memref<128x128xbf16, #tpu.memory_space<vmem>>, %arg7: memref<128x128xbf16, #tpu.memory_space<vmem>>, %arg8: memref<1x128xf32, #tpu.memory_space<vmem>>, %arg9: memref<1x64x128xbf16, #tpu.memory_space<vmem>>) attributes {dimension_semantics = [#tpu.dimension_semantics<parallel>], iteration_bounds = array<i64: 8>, scalar_prefetch = 0 : i64, scratch_operands = 0 : i64, tpu.core_type = #tpu.core_type<tc>, window_params = [{transform_indices = @transform_0, window_bounds = array<i64: 1, 64, 128>}, {pipeline_mode = #tpu.pipeline_mode<synchronous>, transform_indices = @transform_1, window_bounds = array<i64: 128, 128>}, {pipeline_mode = #tpu.pipeline_mode<synchronous>, transform_indices = @transform_2, window_bounds = array<i64: 1, 128>}, {pipeline_mode = #tpu.pipeline_mode<synchronous>, transform_indices = @transform_3, window_bounds = array<i64: 1152, 128>}, {pipeline_mode = #tpu.pipeline_mode<synchronous>, transform_indices = @transform_4, window_bounds = array<i64: 1, 128>}, {pipeline_mode = #tpu.pipeline_mode<synchronous>, transform_indices = @transform_5, window_bounds = array<i64: 128, 128>}, {pipeline_mode = #tpu.pipeline_mode<synchronous>, transform_indices = @transform_6, window_bounds = array<i64: 128, 128>}, {pipeline_mode = #tpu.pipeline_mode<synchronous>, transform_indices = @transform_7, window_bounds = array<i64: 1, 128>}, {transform_indices = @transform_8, window_bounds = array<i64: 1, 64, 128>}]} {
    %c0 = arith.constant 0 : index
    %c0_0 = arith.constant 0 : index
    %c0_1 = arith.constant 0 : index
    %0 = vector.load %arg1[%c0, %c0_0, %c0_1] : memref<1x64x128xbf16, #tpu.memory_space<vmem>>, vector<1x64x128xbf16>
    %1 = vector.shape_cast %0 : vector<1x64x128xbf16> to vector<64x128xbf16>
    %c0_2 = arith.constant 0 : index
    %c0_3 = arith.constant 0 : index
    %2 = vector.load %arg2[%c0_2, %c0_3] : memref<128x128xbf16, #tpu.memory_space<vmem>>, vector<128x128xbf16>
    %cst = arith.constant dense<0.000000e+00> : vector<64x128xf32>
    %3 = tpu.matmul %1, %2, %cst {dimension_numbers = #tpu.dot_dimension_numbers<[1], [0], [0], [1], [0, 0, 1, 1], [], []>} : vector<64x128xbf16>, vector<128x128xbf16>, vector<64x128xf32> -> vector<64x128xf32>
    %c0_4 = arith.constant 0 : index
    %c0_5 = arith.constant 0 : index
    %4 = vector.load %arg3[%c0_4, %c0_5] : memref<1x128xf32, #tpu.memory_space<vmem>>, vector<1x128xf32>
    %5 = vector.broadcast %4 : vector<1x128xf32> to vector<64x128xf32>
    %6 = arith.addf %3, %5 : vector<64x128xf32>
    %cst_6 = arith.constant 0.000000e+00 : f32
    %7 = vector.broadcast %cst_6 : f32 to vector<64x128xf32>
    %8 = arith.maximumf %6, %7 : vector<64x128xf32>
    %9 = arith.truncf %8 : vector<64x128xf32> to vector<64x128xbf16>
    %10 = vector.shape_cast %9 : vector<64x128xbf16> to vector<1x64x128xbf16>
    %cst_7 = arith.constant 0.000000e+00 : bf16
    %11 = vector.broadcast %cst_7 : bf16 to vector<1x16x128xbf16>
    %12 = tpu.concatenate %11, %10, %11 in 1 : vector<1x16x128xbf16>, vector<1x64x128xbf16>, vector<1x16x128xbf16> -> vector<1x96x128xbf16>
    %13 = tpu.iota {dimensions = array<i32: 1>} : vector<1x64x1xi32>
    %c8_i32 = arith.constant 8 : i32
    %c0_i32 = arith.constant 0 : i32
    %14 = arith.cmpi eq, %c8_i32, %c0_i32 : i32
    %c1_i32 = arith.constant 1 : i32
    %15 = arith.select %14, %c1_i32, %c8_i32 : i32
    %16 = vector.broadcast %15 : i32 to vector<1x64x1xi32>
    %17 = arith.remsi %13, %16 : vector<1x64x1xi32>
    %c0_i32_8 = arith.constant 0 : i32
    %18 = vector.broadcast %c0_i32_8 : i32 to vector<1x64x1xi32>
    %19 = arith.cmpi ne, %17, %18 : vector<1x64x1xi32>
    %c0_i32_9 = arith.constant 0 : i32
    %20 = vector.broadcast %c0_i32_9 : i32 to vector<1x64x1xi32>
    %21 = arith.cmpi slt, %17, %20 : vector<1x64x1xi32>
    %c0_i32_10 = arith.constant 0 : i32
    %22 = arith.cmpi slt, %15, %c0_i32_10 : i32
    %23 = vector.broadcast %22 : i1 to vector<1x64x1xi1>
    %24 = vector.broadcast %23 : vector<1x64x1xi1> to vector<1x64x1xi1>
    %25 = arith.xori %21, %24 : vector<1x64x1xi1>
    %26 = arith.andi %25, %19 : vector<1x64x1xi1>
    %27 = vector.broadcast %15 : i32 to vector<1x64x1xi32>
    %28 = arith.addi %17, %27 : vector<1x64x1xi32>
    %29 = arith.select %26, %28, %17 : vector<1x64x1xi1>, vector<1x64x1xi32>
    %c1_i32_11 = arith.constant 1 : i32
    %30 = vector.broadcast %c1_i32_11 : i32 to vector<1x64x1xi32>
    %31 = arith.cmpi sge, %29, %30 : vector<1x64x1xi32>
    %c6_i32 = arith.constant 6 : i32
    %32 = vector.broadcast %c6_i32 : i32 to vector<1x64x1xi32>
    %33 = arith.cmpi sle, %29, %32 : vector<1x64x1xi32>
    %34 = vector.extract_strided_slice %12 {offsets = [0, 7, 0], sizes = [1, 64, 128], strides = [1, 1, 1]} : vector<1x96x128xbf16> to vector<1x64x128xbf16>
    %cst_12 = arith.constant 0.000000e+00 : bf16
    %35 = vector.shape_cast %31 : vector<1x64x1xi1> to vector<1x64x1xi1>
    %36 = vector.broadcast %35 : vector<1x64x1xi1> to vector<1x64x128xi1>
    %37 = vector.broadcast %cst_12 : bf16 to vector<1x64x128xbf16>
    %38 = arith.select %36, %34, %37 : vector<1x64x128xi1>, vector<1x64x128xbf16>
    %39 = vector.extract_strided_slice %12 {offsets = [0, 8, 0], sizes = [1, 64, 128], strides = [1, 1, 1]} : vector<1x96x128xbf16> to vector<1x64x128xbf16>
    %40 = vector.extract_strided_slice %12 {offsets = [0, 9, 0], sizes = [1, 64, 128], strides = [1, 1, 1]} : vector<1x96x128xbf16> to vector<1x64x128xbf16>
    %cst_13 = arith.constant 0.000000e+00 : bf16
    %41 = vector.shape_cast %33 : vector<1x64x1xi1> to vector<1x64x1xi1>
    %42 = vector.broadcast %41 : vector<1x64x1xi1> to vector<1x64x128xi1>
    %43 = vector.broadcast %cst_13 : bf16 to vector<1x64x128xbf16>
    %44 = arith.select %42, %40, %43 : vector<1x64x128xi1>, vector<1x64x128xbf16>
    %45 = vector.extract_strided_slice %12 {offsets = [0, 15, 0], sizes = [1, 64, 128], strides = [1, 1, 1]} : vector<1x96x128xbf16> to vector<1x64x128xbf16>
    %cst_14 = arith.constant 0.000000e+00 : bf16
    %46 = vector.shape_cast %31 : vector<1x64x1xi1> to vector<1x64x1xi1>
    %47 = vector.broadcast %46 : vector<1x64x1xi1> to vector<1x64x128xi1>
    %48 = vector.broadcast %cst_14 : bf16 to vector<1x64x128xbf16>
    %49 = arith.select %47, %45, %48 : vector<1x64x128xi1>, vector<1x64x128xbf16>
    %50 = vector.extract_strided_slice %12 {offsets = [0, 16, 0], sizes = [1, 64, 128], strides = [1, 1, 1]} : vector<1x96x128xbf16> to vector<1x64x128xbf16>
    %51 = vector.extract_strided_slice %12 {offsets = [0, 17, 0], sizes = [1, 64, 128], strides = [1, 1, 1]} : vector<1x96x128xbf16> to vector<1x64x128xbf16>
    %cst_15 = arith.constant 0.000000e+00 : bf16
    %52 = vector.shape_cast %33 : vector<1x64x1xi1> to vector<1x64x1xi1>
    %53 = vector.broadcast %52 : vector<1x64x1xi1> to vector<1x64x128xi1>
    %54 = vector.broadcast %cst_15 : bf16 to vector<1x64x128xbf16>
    %55 = arith.select %53, %51, %54 : vector<1x64x128xi1>, vector<1x64x128xbf16>
    %56 = vector.extract_strided_slice %12 {offsets = [0, 23, 0], sizes = [1, 64, 128], strides = [1, 1, 1]} : vector<1x96x128xbf16> to vector<1x64x128xbf16>
    %cst_16 = arith.constant 0.000000e+00 : bf16
    %57 = vector.shape_cast %31 : vector<1x64x1xi1> to vector<1x64x1xi1>
    %58 = vector.broadcast %57 : vector<1x64x1xi1> to vector<1x64x128xi1>
    %59 = vector.broadcast %cst_16 : bf16 to vector<1x64x128xbf16>
    %60 = arith.select %58, %56, %59 : vector<1x64x128xi1>, vector<1x64x128xbf16>
    %61 = vector.extract_strided_slice %12 {offsets = [0, 24, 0], sizes = [1, 64, 128], strides = [1, 1, 1]} : vector<1x96x128xbf16> to vector<1x64x128xbf16>
    %62 = vector.extract_strided_slice %12 {offsets = [0, 25, 0], sizes = [1, 64, 128], strides = [1, 1, 1]} : vector<1x96x128xbf16> to vector<1x64x128xbf16>
    %cst_17 = arith.constant 0.000000e+00 : bf16
    %63 = vector.shape_cast %33 : vector<1x64x1xi1> to vector<1x64x1xi1>
    %64 = vector.broadcast %63 : vector<1x64x1xi1> to vector<1x64x128xi1>
    %65 = vector.broadcast %cst_17 : bf16 to vector<1x64x128xbf16>
    %66 = arith.select %64, %62, %65 : vector<1x64x128xi1>, vector<1x64x128xbf16>
    %67 = tpu.concatenate %38, %39, %44, %49, %50, %55, %60, %61, %66 in 2 : vector<1x64x128xbf16>, vector<1x64x128xbf16>, vector<1x64x128xbf16>, vector<1x64x128xbf16>, vector<1x64x128xbf16>, vector<1x64x128xbf16>, vector<1x64x128xbf16>, vector<1x64x128xbf16>, vector<1x64x128xbf16> -> vector<1x64x1152xbf16>
    %68 = vector.shape_cast %67 : vector<1x64x1152xbf16> to vector<64x1152xbf16>
    %c0_18 = arith.constant 0 : index
    %c0_19 = arith.constant 0 : index
    %69 = vector.load %arg4[%c0_18, %c0_19] : memref<1152x128xbf16, #tpu.memory_space<vmem>>, vector<1152x128xbf16>
    %cst_20 = arith.constant dense<0.000000e+00> : vector<64x128xf32>
    %70 = tpu.matmul %68, %69, %cst_20 {dimension_numbers = #tpu.dot_dimension_numbers<[1], [0], [0], [1], [0, 0, 1, 1], [], []>} : vector<64x1152xbf16>, vector<1152x128xbf16>, vector<64x128xf32> -> vector<64x128xf32>
    %c0_21 = arith.constant 0 : index
    %c0_22 = arith.constant 0 : index
    %71 = vector.load %arg5[%c0_21, %c0_22] : memref<1x128xf32, #tpu.memory_space<vmem>>, vector<1x128xf32>
    %72 = vector.broadcast %71 : vector<1x128xf32> to vector<64x128xf32>
    %73 = arith.addf %70, %72 : vector<64x128xf32>
    %cst_23 = arith.constant 0.000000e+00 : f32
    %74 = vector.broadcast %cst_23 : f32 to vector<64x128xf32>
    %75 = arith.maximumf %73, %74 : vector<64x128xf32>
    %76 = arith.truncf %75 : vector<64x128xf32> to vector<64x128xbf16>
    %c0_24 = arith.constant 0 : index
    %c0_25 = arith.constant 0 : index
    %77 = vector.load %arg6[%c0_24, %c0_25] : memref<128x128xbf16, #tpu.memory_space<vmem>>, vector<128x128xbf16>
    %cst_26 = arith.constant dense<0.000000e+00> : vector<64x128xf32>
    %78 = tpu.matmul %76, %77, %cst_26 {dimension_numbers = #tpu.dot_dimension_numbers<[1], [0], [0], [1], [0, 0, 1, 1], [], []>} : vector<64x128xbf16>, vector<128x128xbf16>, vector<64x128xf32> -> vector<64x128xf32>
    %c0_27 = arith.constant 0 : index
    %c0_28 = arith.constant 0 : index
    %79 = vector.load %arg7[%c0_27, %c0_28] : memref<128x128xbf16, #tpu.memory_space<vmem>>, vector<128x128xbf16>
    %cst_29 = arith.constant dense<0.000000e+00> : vector<64x128xf32>
    %80 = tpu.matmul %1, %79, %cst_29 {dimension_numbers = #tpu.dot_dimension_numbers<[1], [0], [0], [1], [0, 0, 1, 1], [], []>} : vector<64x128xbf16>, vector<128x128xbf16>, vector<64x128xf32> -> vector<64x128xf32>
    %81 = arith.addf %78, %80 : vector<64x128xf32>
    %c0_30 = arith.constant 0 : index
    %c0_31 = arith.constant 0 : index
    %82 = vector.load %arg8[%c0_30, %c0_31] : memref<1x128xf32, #tpu.memory_space<vmem>>, vector<1x128xf32>
    %83 = vector.broadcast %82 : vector<1x128xf32> to vector<64x128xf32>
    %84 = arith.addf %81, %83 : vector<64x128xf32>
    %cst_32 = arith.constant 0.000000e+00 : f32
    %85 = vector.broadcast %cst_32 : f32 to vector<64x128xf32>
    %86 = arith.maximumf %84, %85 : vector<64x128xf32>
    %87 = vector.shape_cast %86 : vector<64x128xf32> to vector<1x64x128xf32>
    %88 = arith.truncf %87 : vector<1x64x128xf32> to vector<1x64x128xbf16>
    %c0_33 = arith.constant 0 : index
    %c0_34 = arith.constant 0 : index
    %c0_35 = arith.constant 0 : index
    %89 = vector.load %arg9[%c0_33, %c0_34, %c0_35] : memref<1x64x128xbf16, #tpu.memory_space<vmem>>, vector<1x64x128xbf16>
    tpu.vector_store %arg9[%c0_33, %c0_34, %c0_35], %88 {strides = array<i32>} : memref<1x64x128xbf16, #tpu.memory_space<vmem>>, vector<1x64x128xbf16>,
    return
  }
  func.func @transform_0(%arg0: i32) -> (i32, i32, i32) {
    %c0_i32 = arith.constant 0 : i32
    %c0_i32_0 = arith.constant 0 : i32
    %c0_i32_1 = arith.constant 0 : i32
    return %arg0, %c0_i32, %c0_i32_0 : i32, i32, i32
  }
  func.func @transform_1(%arg0: i32) -> (i32, i32) {
    %c0_i32 = arith.constant 0 : i32
    %c0_i32_0 = arith.constant 0 : i32
    %c0_i32_1 = arith.constant 0 : i32
    return %c0_i32, %c0_i32_0 : i32, i32
  }
  func.func @transform_2(%arg0: i32) -> (i32, i32) {
    %c0_i32 = arith.constant 0 : i32
    %c0_i32_0 = arith.constant 0 : i32
    %c0_i32_1 = arith.constant 0 : i32
    return %c0_i32, %c0_i32_0 : i32, i32
  }
  func.func @transform_3(%arg0: i32) -> (i32, i32) {
    %c0_i32 = arith.constant 0 : i32
    %c0_i32_0 = arith.constant 0 : i32
    %c0_i32_1 = arith.constant 0 : i32
    return %c0_i32, %c0_i32_0 : i32, i32
  }
  func.func @transform_4(%arg0: i32) -> (i32, i32) {
    %c0_i32 = arith.constant 0 : i32
    %c0_i32_0 = arith.constant 0 : i32
    %c0_i32_1 = arith.constant 0 : i32
    return %c0_i32, %c0_i32_0 : i32, i32
  }
  func.func @transform_5(%arg0: i32) -> (i32, i32) {
    %c0_i32 = arith.constant 0 : i32
    %c0_i32_0 = arith.constant 0 : i32
    %c0_i32_1 = arith.constant 0 : i32
    return %c0_i32, %c0_i32_0 : i32, i32
  }
  func.func @transform_6(%arg0: i32) -> (i32, i32) {
    %c0_i32 = arith.constant 0 : i32
    %c0_i32_0 = arith.constant 0 : i32
    %c0_i32_1 = arith.constant 0 : i32
    return %c0_i32, %c0_i32_0 : i32, i32
  }
  func.func @transform_7(%arg0: i32) -> (i32, i32) {
    %c0_i32 = arith.constant 0 : i32
    %c0_i32_0 = arith.constant 0 : i32
    %c0_i32_1 = arith.constant 0 : i32
    return %c0_i32, %c0_i32_0 : i32, i32
  }
  func.func @transform_8(%arg0: i32) -> (i32, i32, i32) {
    %c0_i32 = arith.constant 0 : i32
    %c0_i32_0 = arith.constant 0 : i32
    %c0_i32_1 = arith.constant 0 : i32
    return %arg0, %c0_i32, %c0_i32_0 : i32, i32, i32
  }
}

</mosaic_0001>

<llo_original>
// kernel: tpu_custom_call.1
$region0: #{tpu_custom_call.1}
  #allocation0 [shape = 'u32[]', space=smem, size = 0x4, offset = 0x4, fixed_abs, tag = 'smem constant byte address 0x4 - core index']
  #allocation1 [shape = 'u32[144,128]{1,0:T(1,128)}', space=vmem, size = 0x12000, scoped, tag = 'internal scratch']
  %s0 = inlined_call_operand.hbm [shape: bf16[8,64,128], index: 0, kind: input, shape index: {}]
  %s1 = inlined_call_operand.hbm [shape: bf16[128,128], index: 1, kind: input, shape index: {}]
  %s2 = inlined_call_operand.vmem [shape: f32[1,128], index: 2, kind: input, shape index: {}]
  %s3 = inlined_call_operand.hbm [shape: bf16[1152,128], index: 3, kind: input, shape index: {}]
  %s4 = inlined_call_operand.vmem [shape: f32[1,128], index: 4, kind: input, shape index: {}]
  %s5 = inlined_call_operand.hbm [shape: bf16[128,128], index: 5, kind: input, shape index: {}]
  %s6 = inlined_call_operand.hbm [shape: bf16[128,128], index: 6, kind: input, shape index: {}]
  %s7 = inlined_call_operand.vmem [shape: f32[1,128], index: 7, kind: input, shape index: {}]
  %s8 = inlined_call_operand.hbm [shape: bf16[8,64,128], index: 8, kind: output, shape index: {}]
  %s9 = sld [smem:[#allocation0]]
  $region85: #{tpu_custom_call.1} parent=0
    _
  %s11 = ssub.s32 1, %s9
  %s12 = scalar_select 0, %s11, %s9
  $region1: #{tpu_custom_call.1} parent=0
    #allocation2 [shape = 'u8[32768]{0}', space=vmem, size = 0x8000, scoped, tag = 'input window, operand 0']
    #allocation3 [shape = 's32[2]{0}', space=sflag, size = 0x8, scoped, tag = 'scoped memory for tpu_custom_call.1']
    #allocation4 [shape = 's32[2]{0}', space=sflag, size = 0x8, scoped, tag = 'scoped memory for tpu_custom_call.1']
    #allocation5 [shape = 'u8[32768]{0}', space=vmem, size = 0x8000, scoped, tag = 'input window, operand 1, single buffered']
    #allocation6 [shape = 's32[1]{0}', space=sflag, size = 0x4, scoped, tag = 'scoped memory for tpu_custom_call.1']
    #allocation7 [shape = 'u8[294912]{0}', space=vmem, size = 0x48000, scoped, tag = 'input window, operand 3, single buffered']
    #allocation8 [shape = 'u8[32768]{0}', space=vmem, size = 0x8000, scoped, tag = 'input window, operand 5, single buffered']
    #allocation9 [shape = 's32[1]{0}', space=sflag, size = 0x4, scoped, tag = 'scoped memory for tpu_custom_call.1']
    #allocation10 [shape = 'u8[32768]{0}', space=vmem, size = 0x8000, scoped, tag = 'input window, operand 6, single buffered']
    #allocation11 [shape = 'u8[32768]{0}', space=vmem, size = 0x8000, scoped, tag = 'output window, operand 0']
    %13 = vsyncpa [#allocation3], 0
    %s14 = scalar_lea.sflag [#allocation3], 1
    %15 = vsyncpa %s14, 0
    %16 = vsyncpa [#allocation6], 0
    %17 = vsyncpa [#allocation9], 0
    %18 = vsyncpa [#allocation4], 0
    %s19 = scalar_lea.sflag [#allocation4], 1
    %20 = vsyncpa %s19, 0
    loop: start=0, step=1, limit=10
    $region2: #{tpu_custom_call.1} parent=1 // loop_pre_header
      _
    $region3: #{tpu_custom_call.1} parent=1 // loop_header
      %s22 = sphi 0, %s26
      %p23 = scmp.ge.s32.totalorder %s22, 10
      %s32 = sphi 0, %s34
      %s35 = sphi 0, %s32
      %s36 = sphi 0, %s35
      %s52 = sphi 0, %s36
      %s56 = sphi 0, %s56
      %s58 = sphi 0, %s56
      %s59 = sphi 0, %s58
      %s73 = sphi 0, %s59
      %s77 = sphi 0, %s77
      %s79 = sphi 0, %s77
      %s80 = sphi 0, %s79
      %s94 = sphi 0, %s80
      %s98 = sphi 0, %s98
      %s100 = sphi 0, %s98
      %s101 = sphi 0, %s100
      %s115 = sphi 0, %s101
      %s119 = sphi 0, %s119
      %s121 = sphi 0, %s119
      %s122 = sphi 0, %s121
      %s136 = sphi 0, %s122
      %s140 = sphi 0, %s140
      %s142 = sphi 0, %s140
      %s143 = sphi 0, %s142
      %s157 = sphi 0, %s143
      %s161 = sphi 0, %s161
      %s163 = sphi 0, %s161
      %s164 = sphi 0, %s163
      %s178 = sphi 0, %s164
      %s182 = sphi 0, %s182
      %s184 = sphi 0, %s182
      %s185 = sphi 0, %s184
      %s199 = sphi 0, %s185
      %s205 = sphi 0, %s207
      %s208 = sphi 0, %s205
      %s209 = sphi 0, %s208
      %s225 = sphi 0, %s209
    $region4: #{tpu_custom_call.1} parent=1 // loop_header_branch
      %25 = sbr.rel (%p23) target = $region8
    $region5: #{tpu_custom_call.1} parent=1 // loop_body
      %s27 = ssub.s32 %s22, 1
      %s28 = ssub.s32 %s22, 2
      %s29 = sadd.s32 %s22, 1
      %s30 = ssub.s32 %s22, %s29
      %p31 = scmp.eq.s32.totalorder %s30, 0
      %s33 = sadd.s32 %s32, 1
      %s34 = scalar_select %p31, %s32, %s33
      %p37 = pneg %p31
      %p38 = scmp.eq.s32.totalorder %s22, 7
      %p39 = por %p37, %p38
      %p40 = scmp.ne.s32.totalorder %s32, %s35
      %p41 = scmp.eq.s32.totalorder %s22, 0
      %p42 = por %p40, %p41
      %p43 = scmp.ne.s32.totalorder %s32, %s35
      %p44 = scmp.eq.s32.totalorder %s27, 7
      %p45 = por %p43, %p44
      %p46 = scmp.ne.s32.totalorder %s35, %s36
      %p47 = scmp.eq.s32.totalorder %s27, 0
      %p48 = por %p46, %p47
      %p49 = scmp.ne.s32.totalorder %s35, %s36
      %p50 = scmp.eq.s32.totalorder %s28, 7
      %p51 = por %p49, %p50
      %p53 = scmp.ne.s32.totalorder %s36, %s52
      %p54 = scmp.eq.s32.totalorder %s28, 0
      %p55 = por %p53, %p54
      %s57 = sadd.s32 %s56, 1
      %p60 = scmp.eq.s32.totalorder %s22, 7
      %p61 = scmp.ne.s32.totalorder %s56, %s58
      %p62 = scmp.eq.s32.totalorder %s22, 0
      %p63 = por %p61, %p62
      %p64 = scmp.ne.s32.totalorder %s56, %s58
      %p65 = scmp.eq.s32.totalorder %s27, 7
      %p66 = por %p64, %p65
      %p67 = scmp.ne.s32.totalorder %s58, %s59
      %p68 = scmp.eq.s32.totalorder %s27, 0
      %p69 = por %p67, %p68
      %p70 = scmp.ne.s32.totalorder %s58, %s59
      %p71 = scmp.eq.s32.totalorder %s28, 7
      %p72 = por %p70, %p71
      %p74 = scmp.ne.s32.totalorder %s59, %s73
      %p75 = scmp.eq.s32.totalorder %s28, 0
      %p76 = por %p74, %p75
      %s78 = sadd.s32 %s77, 1
      %p81 = scmp.eq.s32.totalorder %s22, 7
      %p82 = scmp.ne.s32.totalorder %s77, %s79
      %p83 = scmp.eq.s32.totalorder %s22, 0
      %p84 = por %p82, %p83
      %p85 = scmp.ne.s32.totalorder %s77, %s79
      %p86 = scmp.eq.s32.totalorder %s27, 7
      %p87 = por %p85, %p86
      %p88 = scmp.ne.s32.totalorder %s79, %s80
      %p89 = scmp.eq.s32.totalorder %s27, 0
      %p90 = por %p88, %p89
      %p91 = scmp.ne.s32.totalorder %s79, %s80
      %p92 = scmp.eq.s32.totalorder %s28, 7
      %p93 = por %p91, %p92
      %p95 = scmp.ne.s32.totalorder %s80, %s94
      %p96 = scmp.eq.s32.totalorder %s28, 0
      %p97 = por %p95, %p96
      %s99 = sadd.s32 %s98, 1
      %p102 = scmp.eq.s32.totalorder %s22, 7
      %p103 = scmp.ne.s32.totalorder %s98, %s100
      %p104 = scmp.eq.s32.totalorder %s22, 0
      %p105 = por %p103, %p104
      %p106 = scmp.ne.s32.totalorder %s98, %s100
      %p107 = scmp.eq.s32.totalorder %s27, 7
      %p108 = por %p106, %p107
      %p109 = scmp.ne.s32.totalorder %s100, %s101
      %p110 = scmp.eq.s32.totalorder %s27, 0
      %p111 = por %p109, %p110
      %p112 = scmp.ne.s32.totalorder %s100, %s101
      %p113 = scmp.eq.s32.totalorder %s28, 7
      %p114 = por %p112, %p113
      %p116 = scmp.ne.s32.totalorder %s101, %s115
      %p117 = scmp.eq.s32.totalorder %s28, 0
      %p118 = por %p116, %p117
      %s120 = sadd.s32 %s119, 1
      %p123 = scmp.eq.s32.totalorder %s22, 7
      %p124 = scmp.ne.s32.totalorder %s119, %s121
      %p125 = scmp.eq.s32.totalorder %s22, 0
      %p126 = por %p124, %p125
      %p127 = scmp.ne.s32.totalorder %s119, %s121
      %p128 = scmp.eq.s32.totalorder %s27, 7
      %p129 = por %p127, %p128
      %p130 = scmp.ne.s32.totalorder %s121, %s122
      %p131 = scmp.eq.s32.totalorder %s27, 0
      %p132 = por %p130, %p131
      %p133 = scmp.ne.s32.totalorder %s121, %s122
      %p134 = scmp.eq.s32.totalorder %s28, 7
      %p135 = por %p133, %p134
      %p137 = scmp.ne.s32.totalorder %s122, %s136
      %p138 = scmp.eq.s32.totalorder %s28, 0
      %p139 = por %p137, %p138
      %s141 = sadd.s32 %s140, 1
      %p144 = scmp.eq.s32.totalorder %s22, 7
      %p145 = scmp.ne.s32.totalorder %s140, %s142
      %p146 = scmp.eq.s32.totalorder %s22, 0
      %p147 = por %p145, %p146
      %p148 = scmp.ne.s32.totalorder %s140, %s142
      %p149 = scmp.eq.s32.totalorder %s27, 7
      %p150 = por %p148, %p149
      %p151 = scmp.ne.s32.totalorder %s142, %s143
      %p152 = scmp.eq.s32.totalorder %s27, 0
      %p153 = por %p151, %p152
      %p154 = scmp.ne.s32.totalorder %s142, %s143
      %p155 = scmp.eq.s32.totalorder %s28, 7
      %p156 = por %p154, %p155
      %p158 = scmp.ne.s32.totalorder %s143, %s157
      %p159 = scmp.eq.s32.totalorder %s28, 0
      %p160 = por %p158, %p159
      %s162 = sadd.s32 %s161, 1
      %p165 = scmp.eq.s32.totalorder %s22, 7
      %p166 = scmp.ne.s32.totalorder %s161, %s163
      %p167 = scmp.eq.s32.totalorder %s22, 0
      %p168 = por %p166, %p167
      %p169 = scmp.ne.s32.totalorder %s161, %s163
      %p170 = scmp.eq.s32.totalorder %s27, 7
      %p171 = por %p169, %p170
      %p172 = scmp.ne.s32.totalorder %s163, %s164
      %p173 = scmp.eq.s32.totalorder %s27, 0
      %p174 = por %p172, %p173
      %p175 = scmp.ne.s32.totalorder %s163, %s164
      %p176 = scmp.eq.s32.totalorder %s28, 7
      %p177 = por %p175, %p176
      %p179 = scmp.ne.s32.totalorder %s164, %s178
      %p180 = scmp.eq.s32.totalorder %s28, 0
      %p181 = por %p179, %p180
      %s183 = sadd.s32 %s182, 1
      %p186 = scmp.eq.s32.totalorder %s22, 7
      %p187 = scmp.ne.s32.totalorder %s182, %s184
      %p188 = scmp.eq.s32.totalorder %s22, 0
      %p189 = por %p187, %p188
      %p190 = scmp.ne.s32.totalorder %s182, %s184
      %p191 = scmp.eq.s32.totalorder %s27, 7
      %p192 = por %p190, %p191
      %p193 = scmp.ne.s32.totalorder %s184, %s185
      %p194 = scmp.eq.s32.totalorder %s27, 0
      %p195 = por %p193, %p194
      %p196 = scmp.ne.s32.totalorder %s184, %s185
      %p197 = scmp.eq.s32.totalorder %s28, 7
      %p198 = por %p196, %p197
      %p200 = scmp.ne.s32.totalorder %s185, %s199
      %p201 = scmp.eq.s32.totalorder %s28, 0
      %p202 = por %p200, %p201
      %s203 = ssub.s32 %s22, %s29
      %p204 = scmp.eq.s32.totalorder %s203, 0
      %s206 = sadd.s32 %s205, 1
      %s207 = scalar_select %p204, %s205, %s206
      %p210 = pneg %p204
      %p211 = scmp.eq.s32.totalorder %s22, 7
      %p212 = por %p210, %p211
      %p213 = scmp.ne.s32.totalorder %s205, %s208
      %p214 = scmp.eq.s32.totalorder %s22, 0
      %p215 = por %p213, %p214
      %p216 = scmp.ne.s32.totalorder %s205, %s208
      %p217 = scmp.eq.s32.totalorder %s27, 7
      %p218 = por %p216, %p217
      %p219 = scmp.ne.s32.totalorder %s208, %s209
      %p220 = scmp.eq.s32.totalorder %s27, 0
      %p221 = por %p219, %p220
      %p222 = scmp.ne.s32.totalorder %s208, %s209
      %p223 = scmp.eq.s32.totalorder %s28, 7
      %p224 = por %p222, %p223
      %p226 = scmp.ne.s32.totalorder %s209, %s225
      %p227 = scmp.eq.s32.totalorder %s28, 0
      %p228 = por %p226, %p227
      %p229 = scmp.le.s32.totalorder 1, %s22
      %p230 = scmp.lt.s32.totalorder %s22, 9
      %p231 = pnand %p229, %p230
      %p232 = pneg %p231
      // Predicated region
      $region9: #{tpu_custom_call.1} parent=5 // pred_check
        _
      $region10: #{tpu_custom_call.1} parent=5 // pred_check_branch
        %234 = sbr.rel (%p231) target = $region12
      $region11: #{tpu_custom_call.1} parent=5 // pred_region
        %s235 = ssub.s32 %s22, 1
        // Predicated region
        $region13: #{tpu_custom_call.1} parent=11 // pred_check
          %p236 = pneg %p69
        $region14: #{tpu_custom_call.1} parent=11 // pred_check_branch
          %238 = sbr.rel (%p236) target = $region16
        $region15: #{tpu_custom_call.1} parent=11 // pred_region
          %s240 = ssub.s32 1024, 1024
          %241 = vsyncadd [#allocation6], %s240
          %s242 = sshll.u32 [#allocation5], 4
          %s243 = int_to_ptr.vmem [resolvable:$true] %s242
          %248 = dma.hbm_to_vmem [thread:$0]  %s1, 1024, %s243, [#allocation6], 64, 64, 4
        $region16: #{tpu_custom_call.1} parent=11 // pred_fallthru
          _
        // Predicated region
        $region17: #{tpu_custom_call.1} parent=11 // pred_check
          %p249 = pneg %p90
        $region18: #{tpu_custom_call.1} parent=11 // pred_check_branch
          %251 = sbr.rel (%p249) target = $region20
        $region19: #{tpu_custom_call.1} parent=11 // pred_region
          _
        $region20: #{tpu_custom_call.1} parent=11 // pred_fallthru
          _
        // Predicated region
        $region21: #{tpu_custom_call.1} parent=11 // pred_check
          %p252 = pneg %p111
        $region22: #{tpu_custom_call.1} parent=11 // pred_check_branch
          %254 = sbr.rel (%p252) target = $region24
        $region23: #{tpu_custom_call.1} parent=11 // pred_region
          %s256 = ssub.s32 9216, 9216
          %257 = vsyncadd [#allocation6], %s256
          %s258 = sshll.u32 [#allocation7], 4
          %s259 = int_to_ptr.vmem [resolvable:$true] %s258
          %264 = dma.hbm_to_vmem [thread:$0]  %s3, 9216, %s259, [#allocation6], 64, 64, 4
        $region24: #{tpu_custom_call.1} parent=11 // pred_fallthru
          _
        // Predicated region
        $region25: #{tpu_custom_call.1} parent=11 // pred_check
          %p265 = pneg %p132
        $region26: #{tpu_custom_call.1} parent=11 // pred_check_branch
          %267 = sbr.rel (%p265) target = $region28
        $region27: #{tpu_custom_call.1} parent=11 // pred_region
          _
        $region28: #{tpu_custom_call.1} parent=11 // pred_fallthru
          _
        // Predicated region
        $region29: #{tpu_custom_call.1} parent=11 // pred_check
          %p268 = pneg %p153
        $region30: #{tpu_custom_call.1} parent=11 // pred_check_branch
          %270 = sbr.rel (%p268) target = $region32
        $region31: #{tpu_custom_call.1} parent=11 // pred_region
          %s272 = ssub.s32 1024, 1024
          %273 = vsyncadd [#allocation9], %s272
          %s274 = sshll.u32 [#allocation8], 4
          %s275 = int_to_ptr.vmem [resolvable:$true] %s274
          %280 = dma.hbm_to_vmem [thread:$0]  %s5, 1024, %s275, [#allocation9], 64, 64, 4
        $region32: #{tpu_custom_call.1} parent=11 // pred_fallthru
          _
        // Predicated region
        $region33: #{tpu_custom_call.1} parent=11 // pred_check
          %p281 = pneg %p174
        $region34: #{tpu_custom_call.1} parent=11 // pred_check_branch
          %283 = sbr.rel (%p281) target = $region36
        $region35: #{tpu_custom_call.1} parent=11 // pred_region
          %s285 = ssub.s32 1024, 1024
          %286 = vsyncadd [#allocation9], %s285
          %s287 = sshll.u32 [#allocation10], 4
          %s288 = int_to_ptr.vmem [resolvable:$true] %s287
          %293 = dma.hbm_to_vmem [thread:$0]  %s6, 1024, %s288, [#allocation9], 64, 64, 4
        $region36: #{tpu_custom_call.1} parent=11 // pred_fallthru
          _
        // Predicated region
        $region37: #{tpu_custom_call.1} parent=11 // pred_check
          %p294 = pneg %p195
        $region38: #{tpu_custom_call.1} parent=11 // pred_check_branch
          %296 = sbr.rel (%p294) target = $region40
        $region39: #{tpu_custom_call.1} parent=11 // pred_region
          _
        $region40: #{tpu_custom_call.1} parent=11 // pred_fallthru
          _
      $region12: #{tpu_custom_call.1} parent=5 // pred_fallthru
        _
      %p297 = scmp.lt.s32.totalorder %s22, 8
      // Predicated region
      $region41: #{tpu_custom_call.1} parent=5 // pred_check
        %p298 = pneg %p297
      $region42: #{tpu_custom_call.1} parent=5 // pred_check_branch
        %300 = sbr.rel (%p298) target = $region44
      $region43: #{tpu_custom_call.1} parent=5 // pred_region
        // Predicated region
        $region45: #{tpu_custom_call.1} parent=43 // pred_check
          %p301 = pneg %p42
        $region46: #{tpu_custom_call.1} parent=43 // pred_check_branch
          %303 = sbr.rel (%p301) target = $region48
        $region47: #{tpu_custom_call.1} parent=43 // pred_region
          %s304 = sand.u32 %s32, 1
          %s305 = scalar_lea.sflag [#allocation3], %s304
          %s306 = sand.u32 %s32, 1
          %s307 = smul.addr %s306, 32
          %s308 = scalar_lea.vmem [#allocation2], %s307
          %s310 = ssub.s32 512, 512
          %311 = vsyncadd %s305, %s310
          %s312 = smul.addr %s22, 8
          %s313 = smul.addr %s312, 64
          %s314 = scalar_lea.hbm %s0, %s313
          %s315 = sshll.u32 %s308, 4
          %s316 = int_to_ptr.vmem [resolvable:$true] %s315
          %321 = dma.hbm_to_vmem [thread:$0]  %s314, 512, %s316, %s305, 64, 64, 4
        $region48: #{tpu_custom_call.1} parent=43 // pred_fallthru
          _
      $region44: #{tpu_custom_call.1} parent=5 // pred_fallthru
        _
      %p322 = scmp.le.s32.totalorder 1, %s22
      %p323 = scmp.lt.s32.totalorder %s22, 9
      %p324 = pnand %p322, %p323
      %p325 = pneg %p324
      // Predicated region
      $region49: #{tpu_custom_call.1} parent=5 // pred_check
        _
      $region50: #{tpu_custom_call.1} parent=5 // pred_check_branch
        %327 = sbr.rel (%p324) target = $region52
      $region51: #{tpu_custom_call.1} parent=5 // pred_region
        %s328 = ssub.s32 %s22, 1
        %s329 = sand.u32 %s35, 1
        %s330 = scalar_lea.sflag [#allocation3], %s329
        %s331 = sand.u32 %s35, 1
        %s332 = smul.addr %s331, 32
        %s333 = scalar_lea.vmem [#allocation2], %s332
        // Predicated region
        $region53: #{tpu_custom_call.1} parent=51 // pred_check
          %p334 = pneg %p48
        $region54: #{tpu_custom_call.1} parent=51 // pred_check_branch
          %336 = sbr.rel (%p334) target = $region56
        $region55: #{tpu_custom_call.1} parent=51 // pred_region
          %337 = dma.done %s330, 512
        $region56: #{tpu_custom_call.1} parent=51 // pred_fallthru
          _
        // Predicated region
        $region57: #{tpu_custom_call.1} parent=51 // pred_check
          %p338 = pneg %p69
        $region58: #{tpu_custom_call.1} parent=51 // pred_check_branch
          %340 = sbr.rel (%p338) target = $region60
        $region59: #{tpu_custom_call.1} parent=51 // pred_region
          %341 = dma.done [#allocation6], 1024
        $region60: #{tpu_custom_call.1} parent=51 // pred_fallthru
          _
        // Predicated region
        $region61: #{tpu_custom_call.1} parent=51 // pred_check
          %p342 = pneg %p111
        $region62: #{tpu_custom_call.1} parent=51 // pred_check_branch
          %344 = sbr.rel (%p342) target = $region64
        $region63: #{tpu_custom_call.1} parent=51 // pred_region
          %345 = dma.done [#allocation6], 9216
        $region64: #{tpu_custom_call.1} parent=51 // pred_fallthru
          _
        // Predicated region
        $region65: #{tpu_custom_call.1} parent=51 // pred_check
          %p346 = pneg %p153
        $region66: #{tpu_custom_call.1} parent=51 // pred_check_branch
          %348 = sbr.rel (%p346) target = $region68
        $region67: #{tpu_custom_call.1} parent=51 // pred_region
          %349 = dma.done [#allocation9], 1024
        $region68: #{tpu_custom_call.1} parent=51 // pred_fallthru
          _
        // Predicated region
        $region69: #{tpu_custom_call.1} parent=51 // pred_check
          %p350 = pneg %p174
        $region70: #{tpu_custom_call.1} parent=51 // pred_check_branch
          %352 = sbr.rel (%p350) target = $region72
        $region71: #{tpu_custom_call.1} parent=51 // pred_region
          %353 = dma.done [#allocation9], 1024
        $region72: #{tpu_custom_call.1} parent=51 // pred_fallthru
          _
        %s354 = sand.u32 %s35, 1
        %s355 = scalar_lea.sflag [#allocation3], %s354
        %s356 = sand.u32 %s35, 1
        %s357 = smul.addr %s356, 32
        %s358 = scalar_lea.vmem [#allocation2], %s357
        %p359 = pneg %p48
        %p360 = pneg %p45
        %p361 = pneg %p69
        %p362 = pneg %p66
        %p363 = pneg %p90
        %p364 = pneg %p87
        %p365 = pneg %p111
        %p366 = pneg %p108
        %p367 = pneg %p132
        %p368 = pneg %p129
        %p369 = pneg %p153
        %p370 = pneg %p150
        %p371 = pneg %p174
        %p372 = pneg %p171
        %p373 = pneg %p195
        %p374 = pneg %p192
        %p375 = pneg %p221
        %p376 = pneg %p218
        %s377 = sand.u32 %s208, 1
        %s378 = scalar_lea.sflag [#allocation4], %s377
        %s379 = sand.u32 %s208, 1
        %s380 = smul.addr %s379, 32
        %s381 = scalar_lea.vmem [#allocation11], %s380
        %v385 = vld [vmem:[%s333] sm:$0xf]
        %v386 = vld [vmem:[%s333 + $0x4] sm:$0xf]
        %v387 = vld [vmem:[%s333 + $0x8] sm:$0xf]
        %v388 = vld [vmem:[%s333 + $0xc] sm:$0xf]
        %v389 = vld [vmem:[%s333 + $0x10] sm:$0xf]
        %v390 = vld [vmem:[%s333 + $0x14] sm:$0xf]
        %v391 = vld [vmem:[%s333 + $0x18] sm:$0xf]
        %v392 = vld [vmem:[%s333 + $0x1c] sm:$0xf]
        %v393 = vld [vmem:[#allocation5] sm:$0xf]
        %v394 = vld [vmem:[#allocation5 + $0x4] sm:$0xf]
        %v395 = vld [vmem:[#allocation5 + $0x8] sm:$0xf]
        %v396 = vld [vmem:[#allocation5 + $0xc] sm:$0xf]
        %v397 = vld [vmem:[#allocation5 + $0x10] sm:$0xf]
        %v398 = vld [vmem:[#allocation5 + $0x14] sm:$0xf]
        %v399 = vld [vmem:[#allocation5 + $0x18] sm:$0xf]
        %v400 = vld [vmem:[#allocation5 + $0x1c] sm:$0xf]
        %v401 = vld [vmem:[#allocation5 + $0x20] sm:$0xf]
        %v402 = vld [vmem:[#allocation5 + $0x24] sm:$0xf]
        %v403 = vld [vmem:[#allocation5 + $0x28] sm:$0xf]
        %v404 = vld [vmem:[#allocation5 + $0x2c] sm:$0xf]
        %v405 = vld [vmem:[#allocation5 + $0x30] sm:$0xf]
        %v406 = vld [vmem:[#allocation5 + $0x34] sm:$0xf]
        %v407 = vld [vmem:[#allocation5 + $0x38] sm:$0xf]
        %v408 = vld [vmem:[#allocation5 + $0x3c] sm:$0xf]
        %v409 = vld [vmem:[%s2] sm:$0x1]
        %v411 = vlaneseq
        %v412 = vshrl.u32 %v411, 7
        %v413 = vsub.s32 0, %v412
        %v414 = vrot.slane %v409, %v413
        %v424 = vunpack.c.l.b16 %v385
        %v425 = vunpack.c.l.b16 %v386
        %v426 = vunpack.c.l.b16 %v387
        %v427 = vunpack.c.l.b16 %v388
        %v428 = vunpack.c.l.b16 %v389
        %v429 = vunpack.c.l.b16 %v390
        %v430 = vunpack.c.l.b16 %v391
        %v431 = vunpack.c.l.b16 %v392
        %v432 = vpack.c.b16 %v425, %v424
        %v433 = vpack.c.b16 %v427, %v426
        %v434 = vpack.c.b16 %v429, %v428
        %v435 = vpack.c.b16 %v431, %v430
        %v456 = vunpack.c.l.b16 %v393
        %v457 = vunpack.c.l.b16 %v394
        %v458 = vunpack.c.l.b16 %v395
        %v459 = vunpack.c.l.b16 %v396
        %v460 = vunpack.c.l.b16 %v397
        %v461 = vunpack.c.l.b16 %v398
        %v462 = vunpack.c.l.b16 %v399
        %v463 = vunpack.c.l.b16 %v400
        %v464 = vunpack.c.l.b16 %v401
        %v465 = vunpack.c.l.b16 %v402
        %v466 = vunpack.c.l.b16 %v403
        %v467 = vunpack.c.l.b16 %v404
        %v468 = vunpack.c.l.b16 %v405
        %v469 = vunpack.c.l.b16 %v406
        %v470 = vunpack.c.l.b16 %v407
        %v471 = vunpack.c.l.b16 %v408
        %v472 = vpack.c.b16 %v457, %v456
        %v473 = vpack.c.b16 %v459, %v458
        %v474 = vpack.c.b16 %v461, %v460
        %v475 = vpack.c.b16 %v463, %v462
        %v476 = vpack.c.b16 %v465, %v464
        %v477 = vpack.c.b16 %v467, %v466
        %v478 = vpack.c.b16 %v469, %v468
        %v479 = vpack.c.b16 %v471, %v470
        %488 = vmatprep.subr.bf16.mxu0 0
        %489 = vmatpush1.bf16.msra.mxu0 %v472
        %490 = vmatprep.subr.bf16.mxu0 0
        %491 = vmatpush1.bf16.msra.mxu0 %v473
        %492 = vmatprep.subr.bf16.mxu0 0
        %493 = vmatpush1.bf16.msra.mxu0 %v474
        %494 = vmatprep.subr.bf16.mxu0 0
        %495 = vmatpush1.bf16.msra.mxu0 %v475
        %496 = vmatprep.subr.bf16.mxu0 0
        %497 = vmatpush1.bf16.msra.mxu0 %v476
        %498 = vmatprep.subr.bf16.mxu0 0
        %499 = vmatpush1.bf16.msra.mxu0 %v477
        %500 = vmatprep.subr.bf16.mxu0 0
        %501 = vmatpush1.bf16.msra.mxu0 %v478
        %502 = vmatprep.subr.bf16.mxu0 0
        %503 = vmatpush1.bf16.msra.mxu0 %v479
        %504 = vmatprep.subr.bf16.mxu0 0
        %505 = vmatpush1.bf16.msra.mxu0 0
        %506 = vmatprep.subr.bf16.mxu0 0
        %507 = vmatpush1.bf16.msra.mxu0 0
        %508 = vmatprep.subr.bf16.mxu0 0
        %509 = vmatpush1.bf16.msra.mxu0 0
        %510 = vmatprep.subr.bf16.mxu0 0
        %511 = vmatpush1.bf16.msra.mxu0 0
        %512 = vmatprep.subr.bf16.mxu0 0
        %513 = vmatpush1.bf16.msra.mxu0 0
        %514 = vmatprep.subr.bf16.mxu0 0
        %515 = vmatpush1.bf16.msra.mxu0 0
        %516 = vmatprep.subr.bf16.mxu0 0
        %517 = vmatpush1.bf16.msra.mxu0 0
        %518 = vmatprep.subr.bf16.mxu0 0
        %519 = vmatpush1.bf16.msra.mxu0 0
        %520 = vmatprep.mubr.bf16.mxu0 0
        %521 = vmatmul.mubr.bf16.gmra.mrb[0].mxu0 %v432
        %v522 = vpop.f32.mrb[0].mxu0
        %v523 = vadd.f32 %v414, %v522
        %v524 = vpop.f32.mrb[0].mxu0
        %v525 = vpop.f32.mrb[0].mxu0
        %v526 = vadd.f32 %v414, %v525
        %v527 = vpop.f32.mrb[0].mxu0
        %528 = vmatprep.mubr.bf16.mxu0 0
        %529 = vmatmul.mubr.bf16.gmra.mrb[0].mxu0 %v433
        %v530 = vpop.f32.mrb[0].mxu0
        %v531 = vadd.f32 %v414, %v530
        %v532 = vpop.f32.mrb[0].mxu0
        %v533 = vpop.f32.mrb[0].mxu0
        %v534 = vadd.f32 %v414, %v533
        %v535 = vpop.f32.mrb[0].mxu0
        %536 = vmatprep.mubr.bf16.mxu0 0
        %537 = vmatmul.mubr.bf16.gmra.mrb[0].mxu0 %v434
        %v538 = vpop.f32.mrb[0].mxu0
        %v539 = vadd.f32 %v414, %v538
        %v540 = vpop.f32.mrb[0].mxu0
        %v541 = vpop.f32.mrb[0].mxu0
        %v542 = vadd.f32 %v414, %v541
        %v543 = vpop.f32.mrb[0].mxu0
        %544 = vmatprep.mubr.bf16.mxu0 0
        %545 = vmatmul.mubr.bf16.gmra.mrb[0].mxu0 %v435
        %v546 = vpop.f32.mrb[0].mxu0
        %v547 = vadd.f32 %v414, %v546
        %v548 = vpop.f32.mrb[0].mxu0
        %v549 = vpop.f32.mrb[0].mxu0
        %v550 = vadd.f32 %v414, %v549
        %v551 = vpop.f32.mrb[0].mxu0
        %552 = vdwg.mxu0
        %v553 = vmax.f32 %v523, 0.0
        %v554 = vmax.f32 %v526, 0.0
        %v555 = vmax.f32 %v531, 0.0
        %v556 = vmax.f32 %v534, 0.0
        %v557 = vmax.f32 %v539, 0.0
        %v558 = vmax.f32 %v542, 0.0
        %v559 = vmax.f32 %v547, 0.0
        %v560 = vmax.f32 %v550, 0.0
        %v561 = vpack.c.bf16 %v554, %v553
        %v562 = vpack.c.bf16 %v556, %v555
        %v563 = vpack.c.bf16 %v558, %v557
        %v564 = vpack.c.bf16 %v560, %v559
        %v565 = vlaneseq
        %v566 = vshrl.u32 %v565, 7
        %v567 = vadd.s32 %v566, 8
        %v568 = vadd.s32 %v566, 16
        %v569 = vadd.s32 %v566, 24
        %v570 = vadd.s32 %v566, 32
        %v571 = vadd.s32 %v566, 40
        %v572 = vadd.s32 %v566, 48
        %v573 = vadd.s32 %v566, 56
        %vm574 = vcmp.lt.s32.totalorder %v566, 0
        %v575 = vsub.s32 0, %v566
        %v576 = vsel %vm574, %v575, %v566
        %v577 = vshrl.u32 %v576, 3
        %v578 = vand.u32 %v576, 7
        %v579 = vsub.s32 0, %v578
        %v580 = vsel %vm574, %v579, %v578
        %vm581 = vcmp.lt.s32.totalorder %v567, 0
        %v582 = vsub.s32 0, %v567
        %v583 = vsel %vm581, %v582, %v567
        %v584 = vshrl.u32 %v583, 3
        %v585 = vand.u32 %v583, 7
        %v586 = vsub.s32 0, %v585
        %v587 = vsel %vm581, %v586, %v585
        %vm588 = vcmp.lt.s32.totalorder %v568, 0
        %v589 = vsub.s32 0, %v568
        %v590 = vsel %vm588, %v589, %v568
        %v591 = vshrl.u32 %v590, 3
        %v592 = vand.u32 %v590, 7
        %v593 = vsub.s32 0, %v592
        %v594 = vsel %vm588, %v593, %v592
        %vm595 = vcmp.lt.s32.totalorder %v569, 0
        %v596 = vsub.s32 0, %v569
        %v597 = vsel %vm595, %v596, %v569
        %v598 = vshrl.u32 %v597, 3
        %v599 = vand.u32 %v597, 7
        %v600 = vsub.s32 0, %v599
        %v601 = vsel %vm595, %v600, %v599
        %vm602 = vcmp.lt.s32.totalorder %v570, 0
        %v603 = vsub.s32 0, %v570
        %v604 = vsel %vm602, %v603, %v570
        %v605 = vshrl.u32 %v604, 3
        %v606 = vand.u32 %v604, 7
        %v607 = vsub.s32 0, %v606
        %v608 = vsel %vm602, %v607, %v606
        %vm609 = vcmp.lt.s32.totalorder %v571, 0
        %v610 = vsub.s32 0, %v571
        %v611 = vsel %vm609, %v610, %v571
        %v612 = vshrl.u32 %v611, 3
        %v613 = vand.u32 %v611, 7
        %v614 = vsub.s32 0, %v613
        %v615 = vsel %vm609, %v614, %v613
        %vm616 = vcmp.lt.s32.totalorder %v572, 0
        %v617 = vsub.s32 0, %v572
        %v618 = vsel %vm616, %v617, %v572
        %v619 = vshrl.u32 %v618, 3
        %v620 = vand.u32 %v618, 7
        %v621 = vsub.s32 0, %v620
        %v622 = vsel %vm616, %v621, %v620
        %vm623 = vcmp.lt.s32.totalorder %v573, 0
        %v624 = vsub.s32 0, %v573
        %v625 = vsel %vm623, %v624, %v573
        %v626 = vshrl.u32 %v625, 3
        %v627 = vand.u32 %v625, 7
        %v628 = vsub.s32 0, %v627
        %v629 = vsel %vm623, %v628, %v627
        %vm630 = vcmp.ne.s32.totalorder %v580, 0
        %vm631 = vcmp.ne.s32.totalorder %v587, 0
        %vm632 = vcmp.ne.s32.totalorder %v594, 0
        %vm633 = vcmp.ne.s32.totalorder %v601, 0
        %vm634 = vcmp.ne.s32.totalorder %v608, 0
        %vm635 = vcmp.ne.s32.totalorder %v615, 0
        %vm636 = vcmp.ne.s32.totalorder %v622, 0
        %vm637 = vcmp.ne.s32.totalorder %v629, 0
        %vm638 = vcmp.lt.s32.totalorder %v580, 0
        %vm639 = vcmp.lt.s32.totalorder %v587, 0
        %vm640 = vcmp.lt.s32.totalorder %v594, 0
        %vm641 = vcmp.lt.s32.totalorder %v601, 0
        %vm642 = vcmp.lt.s32.totalorder %v608, 0
        %vm643 = vcmp.lt.s32.totalorder %v615, 0
        %vm644 = vcmp.lt.s32.totalorder %v622, 0
        %vm645 = vcmp.lt.s32.totalorder %v629, 0
        %vm646 = vmand %vm638, %vm630
        %vm647 = vmand %vm639, %vm631
        %vm648 = vmand %vm640, %vm632
        %vm649 = vmand %vm641, %vm633
        %vm650 = vmand %vm642, %vm634
        %vm651 = vmand %vm643, %vm635
        %vm652 = vmand %vm644, %vm636
        %vm653 = vmand %vm645, %vm637
        %v654 = vadd.s32 %v580, 8
        %v655 = vadd.s32 %v587, 8
        %v656 = vadd.s32 %v594, 8
        %v657 = vadd.s32 %v601, 8
        %v658 = vadd.s32 %v608, 8
        %v659 = vadd.s32 %v615, 8
        %v660 = vadd.s32 %v622, 8
        %v661 = vadd.s32 %v629, 8
        %v662 = vsel %vm646, %v654, %v580
        %v663 = vsel %vm647, %v655, %v587
        %v664 = vsel %vm648, %v656, %v594
        %v665 = vsel %vm649, %v657, %v601
        %v666 = vsel %vm650, %v658, %v608
        %v667 = vsel %vm651, %v659, %v615
        %v668 = vsel %vm652, %v660, %v622
        %v669 = vsel %vm653, %v661, %v629
        %vm670 = vcmp.ge.s32.totalorder %v662, 1
        %vm671 = vcmp.ge.s32.totalorder %v663, 1
        %vm672 = vcmp.ge.s32.totalorder %v664, 1
        %vm673 = vcmp.ge.s32.totalorder %v665, 1
        %vm674 = vcmp.ge.s32.totalorder %v666, 1
        %vm675 = vcmp.ge.s32.totalorder %v667, 1
        %vm676 = vcmp.ge.s32.totalorder %v668, 1
        %vm677 = vcmp.ge.s32.totalorder %v669, 1
        %vm678 = vcmp.le.s32.totalorder %v662, 6
        %vm679 = vcmp.le.s32.totalorder %v663, 6
        %vm680 = vcmp.le.s32.totalorder %v664, 6
        %vm681 = vcmp.le.s32.totalorder %v665, 6
        %vm682 = vcmp.le.s32.totalorder %v666, 6
        %vm683 = vcmp.le.s32.totalorder %v667, 6
        %vm684 = vcmp.le.s32.totalorder %v668, 6
        %vm685 = vcmp.le.s32.totalorder %v669, 6
        %v686 = vsel %vm670, 1, 0
        %v687 = vsel %vm671, 1, 0
        %v688 = vsel %vm672, 1, 0
        %v689 = vsel %vm673, 1, 0
        %v690 = vsel %vm674, 1, 0
        %v691 = vsel %vm675, 1, 0
        %v692 = vsel %vm676, 1, 0
        %v693 = vsel %vm677, 1, 0
        %vm694 = vcmp.eq.s32.totalorder %v686, 1
        %vm695 = vcmp.eq.s32.totalorder %v687, 1
        %vm696 = vcmp.eq.s32.totalorder %v688, 1
        %vm697 = vcmp.eq.s32.totalorder %v689, 1
        %vm698 = vcmp.eq.s32.totalorder %v690, 1
        %vm699 = vcmp.eq.s32.totalorder %v691, 1
        %vm700 = vcmp.eq.s32.totalorder %v692, 1
        %vm701 = vcmp.eq.s32.totalorder %v693, 1
        %vm702 = vmpackc.low %vm694, %vm694
        %vm703 = vmpackc.low %vm695, %vm695
        %vm704 = vmpackc.low %vm696, %vm696
        %vm705 = vmpackc.low %vm697, %vm697
        %vm706 = vmpackc.low %vm698, %vm698
        %vm707 = vmpackc.low %vm699, %vm699
        %vm708 = vmpackc.low %vm700, %vm700
        %vm709 = vmpackc.low %vm701, %vm701
        %v710 = vsel %vm702, 65537, 0
        %v711 = vsel %vm703, 65537, 0
        %v712 = vsel %vm704, 65537, 0
        %v713 = vsel %vm705, 65537, 0
        %v714 = vsel %vm706, 65537, 0
        %v715 = vsel %vm707, 65537, 0
        %v716 = vsel %vm708, 65537, 0
        %v717 = vsel %vm709, 65537, 0
        %v718 = vunpack.c.l.b16 %v710
        %v719 = vunpack.c.l.b16 %v711
        %v720 = vunpack.c.l.b16 %v712
        %v721 = vunpack.c.l.b16 %v713
        %v722 = vunpack.c.l.b16 %v714
        %v723 = vunpack.c.l.b16 %v715
        %v724 = vunpack.c.l.b16 %v716
        %v725 = vunpack.c.l.b16 %v717
        %v726 = vpack.c.b16 %v719, %v718
        %v727 = vpack.c.b16 %v721, %v720
        %v728 = vpack.c.b16 %v723, %v722
        %v729 = vpack.c.b16 %v725, %v724
        %vm730 = vsmask.f32 3328
        %v732 = vshrl.u32 %v726, 16
        %v734 = vrot.slane %v732, 4
        %v735 = vshll.u32 %v726, 16
        %v737 = vrot.slane %v735, 5
        %v738 = vor.u32 %v734, %v737
        %v740 = vshrl.u32 %v727, 16
        %v742 = vrot.slane %v740, 4
        %v743 = vshll.u32 %v727, 16
        %v745 = vrot.slane %v743, 5
        %v746 = vor.u32 %v742, %v745
        %v747 = vsel %vm730, %v738, %v746
        %v749 = vshrl.u32 %v728, 16
        %v751 = vrot.slane %v749, 4
        %v752 = vshll.u32 %v728, 16
        %v754 = vrot.slane %v752, 5
        %v755 = vor.u32 %v751, %v754
        %v756 = vsel %vm730, %v746, %v755
        %v758 = vshrl.u32 %v729, 16
        %v760 = vrot.slane %v758, 4
        %v761 = vshll.u32 %v729, 16
        %v763 = vrot.slane %v761, 5
        %v764 = vor.u32 %v760, %v763
        %v765 = vsel %vm730, %v755, %v764
        %vm766 = vcmp.ne.s16.totalorder %v747, 0
        %vm767 = vcmp.ne.s16.totalorder %v756, 0
        %vm768 = vcmp.ne.s16.totalorder %v765, 0
        %vm769 = vcmp.ne.s16.totalorder %v764, 0
        %v770 = vsel %vm766, %v561, 0
        %v771 = vsel %vm767, %v562, 0
        %v772 = vsel %vm768, %v563, 0
        %v773 = vsel %vm769, %v564, 0
        %v774 = vsel %vm678, 1, 0
        %v775 = vsel %vm679, 1, 0
        %v776 = vsel %vm680, 1, 0
        %v777 = vsel %vm681, 1, 0
        %v778 = vsel %vm682, 1, 0
        %v779 = vsel %vm683, 1, 0
        %v780 = vsel %vm684, 1, 0
        %v781 = vsel %vm685, 1, 0
        %vm782 = vcmp.eq.s32.totalorder %v774, 1
        %vm783 = vcmp.eq.s32.totalorder %v775, 1
        %vm784 = vcmp.eq.s32.totalorder %v776, 1
        %vm785 = vcmp.eq.s32.totalorder %v777, 1
        %vm786 = vcmp.eq.s32.totalorder %v778, 1
        %vm787 = vcmp.eq.s32.totalorder %v779, 1
        %vm788 = vcmp.eq.s32.totalorder %v780, 1
        %vm789 = vcmp.eq.s32.totalorder %v781, 1
        %vm790 = vmpackc.low %vm782, %vm782
        %vm791 = vmpackc.low %vm783, %vm783
        %vm792 = vmpackc.low %vm784, %vm784
        %vm793 = vmpackc.low %vm785, %vm785
        %vm794 = vmpackc.low %vm786, %vm786
        %vm795 = vmpackc.low %vm787, %vm787
        %vm796 = vmpackc.low %vm788, %vm788
        %vm797 = vmpackc.low %vm789, %vm789
        %v798 = vsel %vm790, 65537, 0
        %v799 = vsel %vm791, 65537, 0
        %v800 = vsel %vm792, 65537, 0
        %v801 = vsel %vm793, 65537, 0
        %v802 = vsel %vm794, 65537, 0
        %v803 = vsel %vm795, 65537, 0
        %v804 = vsel %vm796, 65537, 0
        %v805 = vsel %vm797, 65537, 0
        %v806 = vunpack.c.l.b16 %v798
        %v807 = vunpack.c.l.b16 %v799
        %v808 = vunpack.c.l.b16 %v800
        %v809 = vunpack.c.l.b16 %v801
        %v810 = vunpack.c.l.b16 %v802
        %v811 = vunpack.c.l.b16 %v803
        %v812 = vunpack.c.l.b16 %v804
        %v813 = vunpack.c.l.b16 %v805
        %v814 = vpack.c.b16 %v807, %v806
        %v815 = vpack.c.b16 %v809, %v808
        %v816 = vpack.c.b16 %v811, %v810
        %v817 = vpack.c.b16 %v813, %v812
        %vm818 = vsmask.f32 4352
        %v820 = vshrl.u32 %v814, 16
        %v822 = vrot.slane %v820, 3
        %v823 = vshll.u32 %v814, 16
        %v825 = vrot.slane %v823, 4
        %v826 = vor.u32 %v822, %v825
        %v828 = vshrl.u32 %v815, 16
        %v830 = vrot.slane %v828, 3
        %v831 = vshll.u32 %v815, 16
        %v833 = vrot.slane %v831, 4
        %v834 = vor.u32 %v830, %v833
        %v835 = vsel %vm818, %v826, %v834
        %v837 = vshrl.u32 %v816, 16
        %v839 = vrot.slane %v837, 3
        %v840 = vshll.u32 %v816, 16
        %v842 = vrot.slane %v840, 4
        %v843 = vor.u32 %v839, %v842
        %v844 = vsel %vm818, %v834, %v843
        %v846 = vshrl.u32 %v817, 16
        %v848 = vrot.slane %v846, 3
        %v849 = vshll.u32 %v817, 16
        %v851 = vrot.slane %v849, 4
        %v852 = vor.u32 %v848, %v851
        %v853 = vsel %vm818, %v843, %v852
        %vm854 = vcmp.ne.s16.totalorder %v835, 0
        %vm855 = vcmp.ne.s16.totalorder %v844, 0
        %vm856 = vcmp.ne.s16.totalorder %v853, 0
        %vm857 = vcmp.ne.s16.totalorder %v852, 0
        %v858 = vsel %vm854, %v561, 0
        %v859 = vsel %vm855, %v562, 0
        %v860 = vsel %vm856, %v563, 0
        %v861 = vsel %vm857, %v564, 0
        %vm862 = vsmask.f32 7424
        %v863 = vrot.slane %v735, 1
        %v864 = vor.u32 %v732, %v863
        %v865 = vrot.slane %v743, 1
        %v866 = vsel %vm862, %v864, %v865
        %v867 = vor.u32 %v740, %v865
        %v868 = vrot.slane %v752, 1
        %v869 = vsel %vm862, %v867, %v868
        %v870 = vor.u32 %v749, %v868
        %v871 = vrot.slane %v761, 1
        %v872 = vsel %vm862, %v870, %v871
        %v873 = vor.u32 %v758, %v871
        %vm874 = vcmp.ne.s16.totalorder %v866, 0
        %vm875 = vcmp.ne.s16.totalorder %v869, 0
        %vm876 = vcmp.ne.s16.totalorder %v872, 0
        %vm877 = vcmp.ne.s16.totalorder %v873, 0
        %v878 = vsel %vm874, %v561, 0
        %v879 = vsel %vm875, %v562, 0
        %v880 = vsel %vm876, %v563, 0
        %v881 = vsel %vm877, %v564, 0
        %vm882 = vsmask.f32 256
        %v883 = vrot.slane %v820, 7
        %v884 = vor.u32 %v883, %v823
        %v885 = vrot.slane %v828, 7
        %v886 = vor.u32 %v885, %v831
        %v887 = vsel %vm882, %v883, %v886
        %v888 = vrot.slane %v837, 7
        %v889 = vor.u32 %v888, %v840
        %v890 = vsel %vm882, %v885, %v889
        %v891 = vrot.slane %v846, 7
        %v892 = vor.u32 %v891, %v849
        %v893 = vsel %vm882, %v888, %v892
        %vm894 = vcmp.ne.s16.totalorder %v884, 0
        %vm895 = vcmp.ne.s16.totalorder %v887, 0
        %vm896 = vcmp.ne.s16.totalorder %v890, 0
        %vm897 = vcmp.ne.s16.totalorder %v893, 0
        %v898 = vsel %vm894, %v561, 0
        %v899 = vsel %vm895, %v562, 0
        %v900 = vsel %vm896, %v563, 0
        %v901 = vsel %vm897, %v564, 0
        %vm902 = vcmp.ne.s16.totalorder %v738, 0
        %v903 = vsel %vm902, %v561, 0
        %v904 = vsel %vm766, %v562, 0
        %v905 = vsel %vm767, %v563, 0
        %v906 = vsel %vm768, %v564, 0
        %vm907 = vcmp.ne.s16.totalorder %v826, 0
        %v908 = vsel %vm907, %v561, 0
        %v909 = vsel %vm854, %v562, 0
        %v910 = vsel %vm855, %v563, 0
        %v911 = vsel %vm856, %v564, 0
        %v913 = vshrl.u32 0, 16
        %v915 = vshll.u32 0, 16
        %v917 = vrot.slane %v915, 1
        %v918 = vor.u32 %v913, %v917
        %v920 = vshll.u32 %v561, 16
        %v922 = vrot.slane %v920, 1
        %v923 = vsel %vm862, %v918, %v922
        %v924 = vshrl.u32 %v561, 16
        %v926 = vor.u32 %v924, %v922
        %v928 = vshll.u32 %v562, 16
        %v930 = vrot.slane %v928, 1
        %v931 = vsel %vm862, %v926, %v930
        %v932 = vshrl.u32 %v562, 16
        %v934 = vor.u32 %v932, %v930
        %v936 = vshll.u32 %v563, 16
        %v938 = vrot.slane %v936, 1
        %v939 = vsel %vm862, %v934, %v938
        %v940 = vshrl.u32 %v563, 16
        %v942 = vor.u32 %v940, %v938
        %v944 = vshll.u32 %v564, 16
        %v946 = vrot.slane %v944, 1
        %v947 = vsel %vm862, %v942, %v946
        %v948 = vshrl.u32 %v564, 16
        %v950 = vor.u32 %v948, %v946
        %vm956 = vcmask 1046528
        %v957 = vrot.slane 0, 1
        %v958 = vrot.slane %v858, 1
        %v959 = vsel %vm956, %v957, %v958
        %v960 = vrot.slane %v859, 1
        %v961 = vsel %vm956, %v958, %v960
        %v962 = vrot.slane %v860, 1
        %v963 = vsel %vm956, %v960, %v962
        %v964 = vrot.slane %v861, 1
        %v965 = vsel %vm956, %v962, %v964
        %vm970 = vcmask 1043456
        %v971 = vrot.slane 0, 4
        %v972 = vrot.slane %v878, 4
        %v973 = vsel %vm970, %v971, %v972
        %v974 = vrot.slane %v879, 4
        %v975 = vsel %vm970, %v972, %v974
        %v976 = vrot.slane %v880, 4
        %v977 = vsel %vm970, %v974, %v976
        %v978 = vrot.slane %v881, 4
        %v979 = vsel %vm970, %v976, %v978
        %v980 = vrot.slane %v924, 4
        %v981 = vrot.slane %v920, 5
        %v982 = vor.u32 %v980, %v981
        %v983 = vrot.slane %v932, 4
        %v984 = vrot.slane %v928, 5
        %v985 = vor.u32 %v983, %v984
        %v986 = vsel %vm730, %v982, %v985
        %v987 = vrot.slane %v940, 4
        %v988 = vrot.slane %v936, 5
        %v989 = vor.u32 %v987, %v988
        %v990 = vsel %vm730, %v985, %v989
        %v991 = vrot.slane %v948, 4
        %v992 = vrot.slane %v944, 5
        %v993 = vor.u32 %v991, %v992
        %v994 = vsel %vm730, %v989, %v993
        %vm999 = vcmask 1042432
        %v1000 = vrot.slane %v898, 5
        %v1001 = vrot.slane %v899, 5
        %v1002 = vsel %vm999, %v1000, %v1001
        %v1003 = vrot.slane %v900, 5
        %v1004 = vsel %vm999, %v1001, %v1003
        %v1005 = vrot.slane %v901, 5
        %v1006 = vsel %vm999, %v1003, %v1005
        %v1007 = vrot.slane 0, 5
        %v1008 = vsel %vm999, %v1005, %v1007
        %v1009 = vsel %vm862, %v950, %v917
        %v1014 = vrot.slane %v908, 1
        %v1015 = vrot.slane %v909, 1
        %v1016 = vsel %vm956, %v1014, %v1015
        %v1017 = vrot.slane %v910, 1
        %v1018 = vsel %vm956, %v1015, %v1017
        %v1019 = vrot.slane %v911, 1
        %v1020 = vsel %vm956, %v1017, %v1019
        %v1021 = vsel %vm956, %v1019, %v957
        %v1022 = vld [vmem:[#allocation7] sm:$0xf]
        %v1023 = vld [vmem:[#allocation7 + $0x4] sm:$0xf]
        %v1024 = vld [vmem:[#allocation7 + $0x8] sm:$0xf]
        %v1025 = vld [vmem:[#allocation7 + $0xc] sm:$0xf]
        %v1026 = vld [vmem:[#allocation7 + $0x10] sm:$0xf]
        %v1027 = vld [vmem:[#allocation7 + $0x14] sm:$0xf]
        %v1028 = vld [vmem:[#allocation7 + $0x18] sm:$0xf]
        %v1029 = vld [vmem:[#allocation7 + $0x1c] sm:$0xf]
        %v1030 = vld [vmem:[#allocation7 + $0x20] sm:$0xf]
        %v1031 = vld [vmem:[#allocation7 + $0x24] sm:$0xf]
        %v1032 = vld [vmem:[#allocation7 + $0x28] sm:$0xf]
        %v1033 = vld [vmem:[#allocation7 + $0x2c] sm:$0xf]
        %v1034 = vld [vmem:[#allocation7 + $0x30] sm:$0xf]
        %v1035 = vld [vmem:[#allocation7 + $0x34] sm:$0xf]
        %v1036 = vld [vmem:[#allocation7 + $0x38] sm:$0xf]
        %v1037 = vld [vmem:[#allocation7 + $0x3c] sm:$0xf]
        %v1038 = vld [vmem:[#allocation7 + $0x40] sm:$0xf]
        %v1039 = vld [vmem:[#allocation7 + $0x44] sm:$0xf]
        %v1040 = vld [vmem:[#allocation7 + $0x48] sm:$0xf]
        %v1041 = vld [vmem:[#allocation7 + $0x4c] sm:$0xf]
        %v1042 = vld [vmem:[#allocation7 + $0x50] sm:$0xf]
        %v1043 = vld [vmem:[#allocation7 + $0x54] sm:$0xf]
        %v1044 = vld [vmem:[#allocation7 + $0x58] sm:$0xf]
        %v1045 = vld [vmem:[#allocation7 + $0x5c] sm:$0xf]
        %v1046 = vld [vmem:[#allocation7 + $0x60] sm:$0xf]
        %v1047 = vld [vmem:[#allocation7 + $0x64] sm:$0xf]
        %v1048 = vld [vmem:[#allocation7 + $0x68] sm:$0xf]
        %v1049 = vld [vmem:[#allocation7 + $0x6c] sm:$0xf]
        %v1050 = vld [vmem:[#allocation7 + $0x70] sm:$0xf]
        %v1051 = vld [vmem:[#allocation7 + $0x74] sm:$0xf]
        %v1052 = vld [vmem:[#allocation7 + $0x78] sm:$0xf]
        %v1053 = vld [vmem:[#allocation7 + $0x7c] sm:$0xf]
        %v1054 = vld [vmem:[#allocation7 + $0x80] sm:$0xf]
        %v1055 = vld [vmem:[#allocation7 + $0x84] sm:$0xf]
        %v1056 = vld [vmem:[#allocation7 + $0x88] sm:$0xf]
        %v1057 = vld [vmem:[#allocation7 + $0x8c] sm:$0xf]
        %v1058 = vld [vmem:[#allocation7 + $0x90] sm:$0xf]
        %v1059 = vld [vmem:[#allocation7 + $0x94] sm:$0xf]
        %v1060 = vld [vmem:[#allocation7 + $0x98] sm:$0xf]
        %v1061 = vld [vmem:[#allocation7 + $0x9c] sm:$0xf]
        %v1062 = vld [vmem:[#allocation7 + $0xa0] sm:$0xf]
        %v1063 = vld [vmem:[#allocation7 + $0xa4] sm:$0xf]
        %v1064 = vld [vmem:[#allocation7 + $0xa8] sm:$0xf]
        %v1065 = vld [vmem:[#allocation7 + $0xac] sm:$0xf]
        %v1066 = vld [vmem:[#allocation7 + $0xb0] sm:$0xf]
        %v1067 = vld [vmem:[#allocation7 + $0xb4] sm:$0xf]
        %v1068 = vld [vmem:[#allocation7 + $0xb8] sm:$0xf]
        %v1069 = vld [vmem:[#allocation7 + $0xbc] sm:$0xf]
        %v1070 = vld [vmem:[#allocation7 + $0xc0] sm:$0xf]
        %v1071 = vld [vmem:[#allocation7 + $0xc4] sm:$0xf]
        %v1072 = vld [vmem:[#allocation7 + $0xc8] sm:$0xf]
        %v1073 = vld [vmem:[#allocation7 + $0xcc] sm:$0xf]
        %v1074 = vld [vmem:[#allocation7 + $0xd0] sm:$0xf]
        %v1075 = vld [vmem:[#allocation7 + $0xd4] sm:$0xf]
        %v1076 = vld [vmem:[#allocation7 + $0xd8] sm:$0xf]
        %v1077 = vld [vmem:[#allocation7 + $0xdc] sm:$0xf]
        %v1078 = vld [vmem:[#allocation7 + $0xe0] sm:$0xf]
        %v1079 = vld [vmem:[#allocation7 + $0xe4] sm:$0xf]
        %v1080 = vld [vmem:[#allocation7 + $0xe8] sm:$0xf]
        %v1081 = vld [vmem:[#allocation7 + $0xec] sm:$0xf]
        %v1082 = vld [vmem:[#allocation7 + $0xf0] sm:$0xf]
        %v1083 = vld [vmem:[#allocation7 + $0xf4] sm:$0xf]
        %v1084 = vld [vmem:[#allocation7 + $0xf8] sm:$0xf]
        %v1085 = vld [vmem:[#allocation7 + $0xfc] sm:$0xf]
        %v1086 = vld [vmem:[#allocation7 + $0x100] sm:$0xf]
        %v1087 = vld [vmem:[#allocation7 + $0x104] sm:$0xf]
        %v1088 = vld [vmem:[#allocation7 + $0x108] sm:$0xf]
        %v1089 = vld [vmem:[#allocation7 + $0x10c] sm:$0xf]
        %v1090 = vld [vmem:[#allocation7 + $0x110] sm:$0xf]
        %v1091 = vld [vmem:[#allocation7 + $0x114] sm:$0xf]
        %v1092 = vld [vmem:[#allocation7 + $0x118] sm:$0xf]
        %v1093 = vld [vmem:[#allocation7 + $0x11c] sm:$0xf]
        %v1094 = vld [vmem:[#allocation7 + $0x120] sm:$0xf]
        %v1095 = vld [vmem:[#allocation7 + $0x124] sm:$0xf]
        %v1096 = vld [vmem:[#allocation7 + $0x128] sm:$0xf]
        %v1097 = vld [vmem:[#allocation7 + $0x12c] sm:$0xf]
        %v1098 = vld [vmem:[#allocation7 + $0x130] sm:$0xf]
        %v1099 = vld [vmem:[#allocation7 + $0x134] sm:$0xf]
        %v1100 = vld [vmem:[#allocation7 + $0x138] sm:$0xf]
        %v1101 = vld [vmem:[#allocation7 + $0x13c] sm:$0xf]
        %v1102 = vld [vmem:[#allocation7 + $0x140] sm:$0xf]
        %v1103 = vld [vmem:[#allocation7 + $0x144] sm:$0xf]
        %v1104 = vld [vmem:[#allocation7 + $0x148] sm:$0xf]
        %v1105 = vld [vmem:[#allocation7 + $0x14c] sm:$0xf]
        %v1106 = vld [vmem:[#allocation7 + $0x150] sm:$0xf]
        %v1107 = vld [vmem:[#allocation7 + $0x154] sm:$0xf]
        %v1108 = vld [vmem:[#allocation7 + $0x158] sm:$0xf]
        %v1109 = vld [vmem:[#allocation7 + $0x15c] sm:$0xf]
        %v1110 = vld [vmem:[#allocation7 + $0x160] sm:$0xf]
        %v1111 = vld [vmem:[#allocation7 + $0x164] sm:$0xf]
        %v1112 = vld [vmem:[#allocation7 + $0x168] sm:$0xf]
        %v1113 = vld [vmem:[#allocation7 + $0x16c] sm:$0xf]
        %v1114 = vld [vmem:[#allocation7 + $0x170] sm:$0xf]
        %v1115 = vld [vmem:[#allocation7 + $0x174] sm:$0xf]
        %v1116 = vld [vmem:[#allocation7 + $0x178] sm:$0xf]
        %v1117 = vld [vmem:[#allocation7 + $0x17c] sm:$0xf]
        %v1118 = vld [vmem:[#allocation7 + $0x180] sm:$0xf]
        %v1119 = vld [vmem:[#allocation7 + $0x184] sm:$0xf]
        %v1120 = vld [vmem:[#allocation7 + $0x188] sm:$0xf]
        %v1121 = vld [vmem:[#allocation7 + $0x18c] sm:$0xf]
        %v1122 = vld [vmem:[#allocation7 + $0x190] sm:$0xf]
        %v1123 = vld [vmem:[#allocation7 + $0x194] sm:$0xf]
        %v1124 = vld [vmem:[#allocation7 + $0x198] sm:$0xf]
        %v1125 = vld [vmem:[#allocation7 + $0x19c] sm:$0xf]
        %v1126 = vld [vmem:[#allocation7 + $0x1a0] sm:$0xf]
        %v1127 = vld [vmem:[#allocation7 + $0x1a4] sm:$0xf]
        %v1128 = vld [vmem:[#allocation7 + $0x1a8] sm:$0xf]
        %v1129 = vld [vmem:[#allocation7 + $0x1ac] sm:$0xf]
        %v1130 = vld [vmem:[#allocation7 + $0x1b0] sm:$0xf]
        %v1131 = vld [vmem:[#allocation7 + $0x1b4] sm:$0xf]
        %v1132 = vld [vmem:[#allocation7 + $0x1b8] sm:$0xf]
        %v1133 = vld [vmem:[#allocation7 + $0x1bc] sm:$0xf]
        %v1134 = vld [vmem:[#allocation7 + $0x1c0] sm:$0xf]
        %v1135 = vld [vmem:[#allocation7 + $0x1c4] sm:$0xf]
        %v1136 = vld [vmem:[#allocation7 + $0x1c8] sm:$0xf]
        %v1137 = vld [vmem:[#allocation7 + $0x1cc] sm:$0xf]
        %v1138 = vld [vmem:[#allocation7 + $0x1d0] sm:$0xf]
        %v1139 = vld [vmem:[#allocation7 + $0x1d4] sm:$0xf]
        %v1140 = vld [vmem:[#allocation7 + $0x1d8] sm:$0xf]
        %v1141 = vld [vmem:[#allocation7 + $0x1dc] sm:$0xf]
        %v1142 = vld [vmem:[#allocation7 + $0x1e0] sm:$0xf]
        %v1143 = vld [vmem:[#allocation7 + $0x1e4] sm:$0xf]
        %v1144 = vld [vmem:[#allocation7 + $0x1e8] sm:$0xf]
        %v1145 = vld [vmem:[#allocation7 + $0x1ec] sm:$0xf]
        %v1146 = vld [vmem:[#allocation7 + $0x1f0] sm:$0xf]
        %v1147 = vld [vmem:[#allocation7 + $0x1f4] sm:$0xf]
        %v1148 = vld [vmem:[#allocation7 + $0x1f8] sm:$0xf]
        %v1149 = vld [vmem:[#allocation7 + $0x1fc] sm:$0xf]
        %v1150 = vld [vmem:[#allocation7 + $0x200] sm:$0xf]
        %v1151 = vld [vmem:[#allocation7 + $0x204] sm:$0xf]
        %v1152 = vld [vmem:[#allocation7 + $0x208] sm:$0xf]
        %v1153 = vld [vmem:[#allocation7 + $0x20c] sm:$0xf]
        %v1154 = vld [vmem:[#allocation7 + $0x210] sm:$0xf]
        %v1155 = vld [vmem:[#allocation7 + $0x214] sm:$0xf]
        %v1156 = vld [vmem:[#allocation7 + $0x218] sm:$0xf]
        %v1157 = vld [vmem:[#allocation7 + $0x21c] sm:$0xf]
        %v1158 = vld [vmem:[#allocation7 + $0x220] sm:$0xf]
        %v1159 = vld [vmem:[#allocation7 + $0x224] sm:$0xf]
        %v1160 = vld [vmem:[#allocation7 + $0x228] sm:$0xf]
        %v1161 = vld [vmem:[#allocation7 + $0x22c] sm:$0xf]
        %v1162 = vld [vmem:[#allocation7 + $0x230] sm:$0xf]
        %v1163 = vld [vmem:[#allocation7 + $0x234] sm:$0xf]
        %v1164 = vld [vmem:[#allocation7 + $0x238] sm:$0xf]
        %v1165 = vld [vmem:[#allocation7 + $0x23c] sm:$0xf]
        %v1166 = vld [vmem:[%s4] sm:$0x1]
        %v1168 = vlaneseq
        %v1169 = vshrl.u32 %v1168, 7
        %v1170 = vsub.s32 0, %v1169
        %v1171 = vrot.slane %v1166, %v1170
        %v1173 = vrot.slane %v913, 3
        %v1174 = vrot.slane %v915, 4
        %v1175 = vor.u32 %v1173, %v1174
        %v1177 = vshrl.u32 %v770, 16
        %v1179 = vrot.slane %v1177, 3
        %v1180 = vshll.u32 %v770, 16
        %v1182 = vrot.slane %v1180, 4
        %v1183 = vor.u32 %v1179, %v1182
        %v1184 = vsel %vm818, %v1175, %v1183
        %v1186 = vshrl.u32 %v923, 16
        %v1188 = vrot.slane %v1186, 3
        %v1189 = vshll.u32 %v923, 16
        %v1191 = vrot.slane %v1189, 4
        %v1192 = vor.u32 %v1188, %v1191
        %v1194 = vshrl.u32 %v931, 16
        %v1196 = vrot.slane %v1194, 3
        %v1197 = vshll.u32 %v931, 16
        %v1199 = vrot.slane %v1197, 4
        %v1200 = vor.u32 %v1196, %v1199
        %v1201 = vsel %vm818, %v1192, %v1200
        %v1203 = vshrl.u32 %v959, 16
        %v1205 = vrot.slane %v1203, 3
        %v1206 = vshll.u32 %v959, 16
        %v1208 = vrot.slane %v1206, 4
        %v1209 = vor.u32 %v1205, %v1208
        %v1211 = vshrl.u32 %v961, 16
        %v1213 = vrot.slane %v1211, 3
        %v1214 = vshll.u32 %v961, 16
        %v1216 = vrot.slane %v1214, 4
        %v1217 = vor.u32 %v1213, %v1216
        %v1218 = vsel %vm818, %v1209, %v1217
        %v1220 = vshrl.u32 %v973, 16
        %v1222 = vrot.slane %v1220, 3
        %v1223 = vshll.u32 %v973, 16
        %v1225 = vrot.slane %v1223, 4
        %v1226 = vor.u32 %v1222, %v1225
        %v1228 = vshrl.u32 %v975, 16
        %v1230 = vrot.slane %v1228, 3
        %v1231 = vshll.u32 %v975, 16
        %v1233 = vrot.slane %v1231, 4
        %v1234 = vor.u32 %v1230, %v1233
        %v1235 = vsel %vm818, %v1226, %v1234
        %v1237 = vshrl.u32 %v982, 16
        %v1239 = vrot.slane %v1237, 3
        %v1240 = vshll.u32 %v982, 16
        %v1242 = vrot.slane %v1240, 4
        %v1243 = vor.u32 %v1239, %v1242
        %v1245 = vshrl.u32 %v986, 16
        %v1247 = vrot.slane %v1245, 3
        %v1248 = vshll.u32 %v986, 16
        %v1250 = vrot.slane %v1248, 4
        %v1251 = vor.u32 %v1247, %v1250
        %v1252 = vsel %vm818, %v1243, %v1251
        %v1254 = vshrl.u32 %v1000, 16
        %v1256 = vrot.slane %v1254, 3
        %v1257 = vshll.u32 %v1000, 16
        %v1259 = vrot.slane %v1257, 4
        %v1260 = vor.u32 %v1256, %v1259
        %v1262 = vshrl.u32 %v1002, 16
        %v1264 = vrot.slane %v1262, 3
        %v1265 = vshll.u32 %v1002, 16
        %v1267 = vrot.slane %v1265, 4
        %v1268 = vor.u32 %v1264, %v1267
        %v1269 = vsel %vm818, %v1260, %v1268
        %v1271 = vshrl.u32 %v903, 16
        %v1273 = vrot.slane %v1271, 3
        %v1274 = vshll.u32 %v903, 16
        %v1276 = vrot.slane %v1274, 4
        %v1277 = vor.u32 %v1273, %v1276
        %v1279 = vshrl.u32 %v904, 16
        %v1281 = vrot.slane %v1279, 3
        %v1282 = vshll.u32 %v904, 16
        %v1284 = vrot.slane %v1282, 4
        %v1285 = vor.u32 %v1281, %v1284
        %v1286 = vsel %vm818, %v1277, %v1285
        %v1288 = vshrl.u32 %v939, 16
        %v1290 = vrot.slane %v1288, 3
        %v1291 = vshll.u32 %v939, 16
        %v1293 = vrot.slane %v1291, 4
        %v1294 = vor.u32 %v1290, %v1293
        %v1295 = vsel %vm818, %v1200, %v1294
        %v1297 = vshrl.u32 %v1016, 16
        %v1299 = vrot.slane %v1297, 3
        %v1300 = vshll.u32 %v1016, 16
        %v1302 = vrot.slane %v1300, 4
        %v1303 = vor.u32 %v1299, %v1302
        %v1305 = vshrl.u32 %v1018, 16
        %v1307 = vrot.slane %v1305, 3
        %v1308 = vshll.u32 %v1018, 16
        %v1310 = vrot.slane %v1308, 4
        %v1311 = vor.u32 %v1307, %v1310
        %v1312 = vsel %vm818, %v1303, %v1311
        %v1314 = vshrl.u32 %v771, 16
        %v1316 = vrot.slane %v1314, 3
        %v1317 = vshll.u32 %v771, 16
        %v1319 = vrot.slane %v1317, 4
        %v1320 = vor.u32 %v1316, %v1319
        %v1321 = vsel %vm818, %v1183, %v1320
        %v1323 = vshrl.u32 %v963, 16
        %v1325 = vrot.slane %v1323, 3
        %v1326 = vshll.u32 %v963, 16
        %v1328 = vrot.slane %v1326, 4
        %v1329 = vor.u32 %v1325, %v1328
        %v1330 = vsel %vm818, %v1217, %v1329
        %v1332 = vshrl.u32 %v977, 16
        %v1334 = vrot.slane %v1332, 3
        %v1335 = vshll.u32 %v977, 16
        %v1337 = vrot.slane %v1335, 4
        %v1338 = vor.u32 %v1334, %v1337
        %v1339 = vsel %vm818, %v1234, %v1338
        %v1341 = vshrl.u32 %v990, 16
        %v1343 = vrot.slane %v1341, 3
        %v1344 = vshll.u32 %v990, 16
        %v1346 = vrot.slane %v1344, 4
        %v1347 = vor.u32 %v1343, %v1346
        %v1348 = vsel %vm818, %v1251, %v1347
        %v1350 = vshrl.u32 %v1004, 16
        %v1352 = vrot.slane %v1350, 3
        %v1353 = vshll.u32 %v1004, 16
        %v1355 = vrot.slane %v1353, 4
        %v1356 = vor.u32 %v1352, %v1355
        %v1357 = vsel %vm818, %v1268, %v1356
        %v1359 = vshrl.u32 %v905, 16
        %v1361 = vrot.slane %v1359, 3
        %v1362 = vshll.u32 %v905, 16
        %v1364 = vrot.slane %v1362, 4
        %v1365 = vor.u32 %v1361, %v1364
        %v1366 = vsel %vm818, %v1285, %v1365
        %v1368 = vshrl.u32 %v947, 16
        %v1370 = vrot.slane %v1368, 3
        %v1371 = vshll.u32 %v947, 16
        %v1373 = vrot.slane %v1371, 4
        %v1374 = vor.u32 %v1370, %v1373
        %v1375 = vsel %vm818, %v1294, %v1374
        %v1377 = vshrl.u32 %v1020, 16
        %v1379 = vrot.slane %v1377, 3
        %v1380 = vshll.u32 %v1020, 16
        %v1382 = vrot.slane %v1380, 4
        %v1383 = vor.u32 %v1379, %v1382
        %v1384 = vsel %vm818, %v1311, %v1383
        %v1386 = vshrl.u32 %v772, 16
        %v1388 = vrot.slane %v1386, 3
        %v1389 = vshll.u32 %v772, 16
        %v1391 = vrot.slane %v1389, 4
        %v1392 = vor.u32 %v1388, %v1391
        %v1393 = vsel %vm818, %v1320, %v1392
        %v1395 = vshrl.u32 %v965, 16
        %v1397 = vrot.slane %v1395, 3
        %v1398 = vshll.u32 %v965, 16
        %v1400 = vrot.slane %v1398, 4
        %v1401 = vor.u32 %v1397, %v1400
        %v1402 = vsel %vm818, %v1329, %v1401
        %v1404 = vshrl.u32 %v979, 16
        %v1406 = vrot.slane %v1404, 3
        %v1407 = vshll.u32 %v979, 16
        %v1409 = vrot.slane %v1407, 4
        %v1410 = vor.u32 %v1406, %v1409
        %v1411 = vsel %vm818, %v1338, %v1410
        %v1413 = vshrl.u32 %v994, 16
        %v1415 = vrot.slane %v1413, 3
        %v1416 = vshll.u32 %v994, 16
        %v1418 = vrot.slane %v1416, 4
        %v1419 = vor.u32 %v1415, %v1418
        %v1420 = vsel %vm818, %v1347, %v1419
        %v1422 = vshrl.u32 %v1006, 16
        %v1424 = vrot.slane %v1422, 3
        %v1425 = vshll.u32 %v1006, 16
        %v1427 = vrot.slane %v1425, 4
        %v1428 = vor.u32 %v1424, %v1427
        %v1429 = vsel %vm818, %v1356, %v1428
        %v1431 = vshrl.u32 %v906, 16
        %v1433 = vrot.slane %v1431, 3
        %v1434 = vshll.u32 %v906, 16
        %v1436 = vrot.slane %v1434, 4
        %v1437 = vor.u32 %v1433, %v1436
        %v1438 = vsel %vm818, %v1365, %v1437
        %v1440 = vshrl.u32 %v1009, 16
        %v1442 = vrot.slane %v1440, 3
        %v1443 = vshll.u32 %v1009, 16
        %v1445 = vrot.slane %v1443, 4
        %v1446 = vor.u32 %v1442, %v1445
        %v1447 = vsel %vm818, %v1374, %v1446
        %v1449 = vshrl.u32 %v1021, 16
        %v1451 = vrot.slane %v1449, 3
        %v1452 = vshll.u32 %v1021, 16
        %v1454 = vrot.slane %v1452, 4
        %v1455 = vor.u32 %v1451, %v1454
        %v1456 = vsel %vm818, %v1383, %v1455
        %v1458 = vshrl.u32 %v773, 16
        %v1460 = vrot.slane %v1458, 3
        %v1461 = vshll.u32 %v773, 16
        %v1463 = vrot.slane %v1461, 4
        %v1464 = vor.u32 %v1460, %v1463
        %v1465 = vsel %vm818, %v1392, %v1464
        %v1467 = vshrl.u32 %v950, 16
        %v1469 = vrot.slane %v1467, 3
        %v1470 = vshll.u32 %v950, 16
        %v1472 = vrot.slane %v1470, 4
        %v1473 = vor.u32 %v1469, %v1472
        %v1474 = vsel %vm818, %v1374, %v1473
        %v1476 = vshrl.u32 %v964, 16
        %v1478 = vrot.slane %v1476, 3
        %v1479 = vshll.u32 %v964, 16
        %v1481 = vrot.slane %v1479, 4
        %v1482 = vor.u32 %v1478, %v1481
        %v1483 = vsel %vm818, %v1401, %v1482
        %v1485 = vshrl.u32 %v978, 16
        %v1487 = vrot.slane %v1485, 3
        %v1488 = vshll.u32 %v978, 16
        %v1490 = vrot.slane %v1488, 4
        %v1491 = vor.u32 %v1487, %v1490
        %v1492 = vsel %vm818, %v1410, %v1491
        %v1494 = vshrl.u32 %v993, 16
        %v1496 = vrot.slane %v1494, 3
        %v1497 = vshll.u32 %v993, 16
        %v1499 = vrot.slane %v1497, 4
        %v1500 = vor.u32 %v1496, %v1499
        %v1501 = vsel %vm818, %v1419, %v1500
        %v1503 = vshrl.u32 %v1008, 16
        %v1505 = vrot.slane %v1503, 3
        %v1506 = vshll.u32 %v1008, 16
        %v1508 = vrot.slane %v1506, 4
        %v1509 = vor.u32 %v1505, %v1508
        %v1510 = vsel %vm818, %v1428, %v1509
        %v1511 = vsel %vm818, %v1437, %v1175
        %v1513 = vshrl.u32 %v918, 16
        %v1515 = vrot.slane %v1513, 3
        %v1516 = vshll.u32 %v918, 16
        %v1518 = vrot.slane %v1516, 4
        %v1519 = vor.u32 %v1515, %v1518
        %v1520 = vsel %vm818, %v1446, %v1519
        %v1522 = vshrl.u32 %v957, 16
        %v1524 = vrot.slane %v1522, 3
        %v1525 = vshll.u32 %v957, 16
        %v1527 = vrot.slane %v1525, 4
        %v1528 = vor.u32 %v1524, %v1527
        %v1529 = vsel %vm818, %v1455, %v1528
        %v1708 = vunpack.c.l.b16 %v1022
        %v1709 = vunpack.c.l.b16 %v1023
        %v1710 = vunpack.c.l.b16 %v1024
        %v1711 = vunpack.c.l.b16 %v1025
        %v1712 = vunpack.c.l.b16 %v1026
        %v1713 = vunpack.c.l.b16 %v1027
        %v1714 = vunpack.c.l.b16 %v1028
        %v1715 = vunpack.c.l.b16 %v1029
        %v1716 = vunpack.c.l.b16 %v1030
        %v1717 = vunpack.c.l.b16 %v1031
        %v1718 = vunpack.c.l.b16 %v1032
        %v1719 = vunpack.c.l.b16 %v1033
        %v1720 = vunpack.c.l.b16 %v1034
        %v1721 = vunpack.c.l.b16 %v1035
        %v1722 = vunpack.c.l.b16 %v1036
        %v1723 = vunpack.c.l.b16 %v1037
        %v1724 = vunpack.c.l.b16 %v1038
        %v1725 = vunpack.c.l.b16 %v1039
        %v1726 = vunpack.c.l.b16 %v1040
        %v1727 = vunpack.c.l.b16 %v1041
        %v1728 = vunpack.c.l.b16 %v1042
        %v1729 = vunpack.c.l.b16 %v1043
        %v1730 = vunpack.c.l.b16 %v1044
        %v1731 = vunpack.c.l.b16 %v1045
        %v1732 = vunpack.c.l.b16 %v1046
        %v1733 = vunpack.c.l.b16 %v1047
        %v1734 = vunpack.c.l.b16 %v1048
        %v1735 = vunpack.c.l.b16 %v1049
        %v1736 = vunpack.c.l.b16 %v1050
        %v1737 = vunpack.c.l.b16 %v1051
        %v1738 = vunpack.c.l.b16 %v1052
        %v1739 = vunpack.c.l.b16 %v1053
        %v1740 = vunpack.c.l.b16 %v1054
        %v1741 = vunpack.c.l.b16 %v1055
        %v1742 = vunpack.c.l.b16 %v1056
        %v1743 = vunpack.c.l.b16 %v1057
        %v1744 = vunpack.c.l.b16 %v1058
        %v1745 = vunpack.c.l.b16 %v1059
        %v1746 = vunpack.c.l.b16 %v1060
        %v1747 = vunpack.c.l.b16 %v1061
        %v1748 = vunpack.c.l.b16 %v1062
        %v1749 = vunpack.c.l.b16 %v1063
        %v1750 = vunpack.c.l.b16 %v1064
        %v1751 = vunpack.c.l.b16 %v1065
        %v1752 = vunpack.c.l.b16 %v1066
        %v1753 = vunpack.c.l.b16 %v1067
        %v1754 = vunpack.c.l.b16 %v1068
        %v1755 = vunpack.c.l.b16 %v1069
        %v1756 = vunpack.c.l.b16 %v1070
        %v1757 = vunpack.c.l.b16 %v1071
        %v1758 = vunpack.c.l.b16 %v1072
        %v1759 = vunpack.c.l.b16 %v1073
        %v1760 = vunpack.c.l.b16 %v1074
        %v1761 = vunpack.c.l.b16 %v1075
        %v1762 = vunpack.c.l.b16 %v1076
        %v1763 = vunpack.c.l.b16 %v1077
        %v1764 = vunpack.c.l.b16 %v1078
        %v1765 = vunpack.c.l.b16 %v1079
        %v1766 = vunpack.c.l.b16 %v1080
        %v1767 = vunpack.c.l.b16 %v1081
        %v1768 = vunpack.c.l.b16 %v1082
        %v1769 = vunpack.c.l.b16 %v1083
        %v1770 = vunpack.c.l.b16 %v1084
        %v1771 = vunpack.c.l.b16 %v1085
        %v1772 = vunpack.c.l.b16 %v1086
        %v1773 = vunpack.c.l.b16 %v1087
        %v1774 = vunpack.c.l.b16 %v1088
        %v1775 = vunpack.c.l.b16 %v1089
        %v1776 = vunpack.c.l.b16 %v1090
        %v1777 = vunpack.c.l.b16 %v1091
        %v1778 = vunpack.c.l.b16 %v1092
        %v1779 = vunpack.c.l.b16 %v1093
        %v1780 = vunpack.c.l.b16 %v1094
        %v1781 = vunpack.c.l.b16 %v1095
        %v1782 = vunpack.c.l.b16 %v1096
        %v1783 = vunpack.c.l.b16 %v1097
        %v1784 = vunpack.c.l.b16 %v1098
        %v1785 = vunpack.c.l.b16 %v1099
        %v1786 = vunpack.c.l.b16 %v1100
        %v1787 = vunpack.c.l.b16 %v1101
        %v1788 = vunpack.c.l.b16 %v1102
        %v1789 = vunpack.c.l.b16 %v1103
        %v1790 = vunpack.c.l.b16 %v1104
        %v1791 = vunpack.c.l.b16 %v1105
        %v1792 = vunpack.c.l.b16 %v1106
        %v1793 = vunpack.c.l.b16 %v1107
        %v1794 = vunpack.c.l.b16 %v1108
        %v1795 = vunpack.c.l.b16 %v1109
        %v1796 = vunpack.c.l.b16 %v1110
        %v1797 = vunpack.c.l.b16 %v1111
        %v1798 = vunpack.c.l.b16 %v1112
        %v1799 = vunpack.c.l.b16 %v1113
        %v1800 = vunpack.c.l.b16 %v1114
        %v1801 = vunpack.c.l.b16 %v1115
        %v1802 = vunpack.c.l.b16 %v1116
        %v1803 = vunpack.c.l.b16 %v1117
        %v1804 = vunpack.c.l.b16 %v1118
        %v1805 = vunpack.c.l.b16 %v1119
        %v1806 = vunpack.c.l.b16 %v1120
        %v1807 = vunpack.c.l.b16 %v1121
        %v1808 = vunpack.c.l.b16 %v1122
        %v1809 = vunpack.c.l.b16 %v1123
        %v1810 = vunpack.c.l.b16 %v1124
        %v1811 = vunpack.c.l.b16 %v1125
        %v1812 = vunpack.c.l.b16 %v1126
        %v1813 = vunpack.c.l.b16 %v1127
        %v1814 = vunpack.c.l.b16 %v1128
        %v1815 = vunpack.c.l.b16 %v1129
        %v1816 = vunpack.c.l.b16 %v1130
        %v1817 = vunpack.c.l.b16 %v1131
        %v1818 = vunpack.c.l.b16 %v1132
        %v1819 = vunpack.c.l.b16 %v1133
        %v1820 = vunpack.c.l.b16 %v1134
        %v1821 = vunpack.c.l.b16 %v1135
        %v1822 = vunpack.c.l.b16 %v1136
        %v1823 = vunpack.c.l.b16 %v1137
        %v1824 = vunpack.c.l.b16 %v1138
        %v1825 = vunpack.c.l.b16 %v1139
        %v1826 = vunpack.c.l.b16 %v1140
        %v1827 = vunpack.c.l.b16 %v1141
        %v1828 = vunpack.c.l.b16 %v1142
        %v1829 = vunpack.c.l.b16 %v1143
        %v1830 = vunpack.c.l.b16 %v1144
        %v1831 = vunpack.c.l.b16 %v1145
        %v1832 = vunpack.c.l.b16 %v1146
        %v1833 = vunpack.c.l.b16 %v1147
        %v1834 = vunpack.c.l.b16 %v1148
        %v1835 = vunpack.c.l.b16 %v1149
        %v1836 = vunpack.c.l.b16 %v1150
        %v1837 = vunpack.c.l.b16 %v1151
        %v1838 = vunpack.c.l.b16 %v1152
        %v1839 = vunpack.c.l.b16 %v1153
        %v1840 = vunpack.c.l.b16 %v1154
        %v1841 = vunpack.c.l.b16 %v1155
        %v1842 = vunpack.c.l.b16 %v1156
        %v1843 = vunpack.c.l.b16 %v1157
        %v1844 = vunpack.c.l.b16 %v1158
        %v1845 = vunpack.c.l.b16 %v1159
        %v1846 = vunpack.c.l.b16 %v1160
        %v1847 = vunpack.c.l.b16 %v1161
        %v1848 = vunpack.c.l.b16 %v1162
        %v1849 = vunpack.c.l.b16 %v1163
        %v1850 = vunpack.c.l.b16 %v1164
        %v1851 = vunpack.c.l.b16 %v1165
        %v1852 = vpack.c.b16 %v1709, %v1708
        %v1853 = vpack.c.b16 %v1711, %v1710
        %v1854 = vpack.c.b16 %v1713, %v1712
        %v1855 = vpack.c.b16 %v1715, %v1714
        %v1856 = vpack.c.b16 %v1717, %v1716
        %v1857 = vpack.c.b16 %v1719, %v1718
        %v1858 = vpack.c.b16 %v1721, %v1720
        %v1859 = vpack.c.b16 %v1723, %v1722
        %v1860 = vpack.c.b16 %v1725, %v1724
        %v1861 = vpack.c.b16 %v1727, %v1726
        %v1862 = vpack.c.b16 %v1729, %v1728
        %v1863 = vpack.c.b16 %v1731, %v1730
        %v1864 = vpack.c.b16 %v1733, %v1732
        %v1865 = vpack.c.b16 %v1735, %v1734
        %v1866 = vpack.c.b16 %v1737, %v1736
        %v1867 = vpack.c.b16 %v1739, %v1738
        %v1868 = vpack.c.b16 %v1741, %v1740
        %v1869 = vpack.c.b16 %v1743, %v1742
        %v1870 = vpack.c.b16 %v1745, %v1744
        %v1871 = vpack.c.b16 %v1747, %v1746
        %v1872 = vpack.c.b16 %v1749, %v1748
        %v1873 = vpack.c.b16 %v1751, %v1750
        %v1874 = vpack.c.b16 %v1753, %v1752
        %v1875 = vpack.c.b16 %v1755, %v1754
        %v1876 = vpack.c.b16 %v1757, %v1756
        %v1877 = vpack.c.b16 %v1759, %v1758
        %v1878 = vpack.c.b16 %v1761, %v1760
        %v1879 = vpack.c.b16 %v1763, %v1762
        %v1880 = vpack.c.b16 %v1765, %v1764
        %v1881 = vpack.c.b16 %v1767, %v1766
        %v1882 = vpack.c.b16 %v1769, %v1768
        %v1883 = vpack.c.b16 %v1771, %v1770
        %v1884 = vpack.c.b16 %v1773, %v1772
        %v1885 = vpack.c.b16 %v1775, %v1774
        %v1886 = vpack.c.b16 %v1777, %v1776
        %v1887 = vpack.c.b16 %v1779, %v1778
        %v1888 = vpack.c.b16 %v1781, %v1780
        %v1889 = vpack.c.b16 %v1783, %v1782
        %v1890 = vpack.c.b16 %v1785, %v1784
        %v1891 = vpack.c.b16 %v1787, %v1786
        %v1892 = vpack.c.b16 %v1789, %v1788
        %v1893 = vpack.c.b16 %v1791, %v1790
        %v1894 = vpack.c.b16 %v1793, %v1792
        %v1895 = vpack.c.b16 %v1795, %v1794
        %v1896 = vpack.c.b16 %v1797, %v1796
        %v1897 = vpack.c.b16 %v1799, %v1798
        %v1898 = vpack.c.b16 %v1801, %v1800
        %v1899 = vpack.c.b16 %v1803, %v1802
        %v1900 = vpack.c.b16 %v1805, %v1804
        %v1901 = vpack.c.b16 %v1807, %v1806
        %v1902 = vpack.c.b16 %v1809, %v1808
        %v1903 = vpack.c.b16 %v1811, %v1810
        %v1904 = vpack.c.b16 %v1813, %v1812
        %v1905 = vpack.c.b16 %v1815, %v1814
        %v1906 = vpack.c.b16 %v1817, %v1816
        %v1907 = vpack.c.b16 %v1819, %v1818
        %v1908 = vpack.c.b16 %v1821, %v1820
        %v1909 = vpack.c.b16 %v1823, %v1822
        %v1910 = vpack.c.b16 %v1825, %v1824
        %v1911 = vpack.c.b16 %v1827, %v1826
        %v1912 = vpack.c.b16 %v1829, %v1828
        %v1913 = vpack.c.b16 %v1831, %v1830
        %v1914 = vpack.c.b16 %v1833, %v1832
        %v1915 = vpack.c.b16 %v1835, %v1834
        %v1916 = vpack.c.b16 %v1837, %v1836
        %v1917 = vpack.c.b16 %v1839, %v1838
        %v1918 = vpack.c.b16 %v1841, %v1840
        %v1919 = vpack.c.b16 %v1843, %v1842
        %v1920 = vpack.c.b16 %v1845, %v1844
        %v1921 = vpack.c.b16 %v1847, %v1846
        %v1922 = vpack.c.b16 %v1849, %v1848
        %v1923 = vpack.c.b16 %v1851, %v1850
        %1996 = vmatprep.subr.bf16.mxu0 0
        %1997 = vmatpush1.bf16.msra.mxu0 %v1852
        %1998 = vmatprep.subr.bf16.mxu0 0
        %1999 = vmatpush1.bf16.msra.mxu0 %v1853
        %2000 = vmatprep.subr.bf16.mxu0 0
        %2001 = vmatpush1.bf16.msra.mxu0 %v1854
        %2002 = vmatprep.subr.bf16.mxu0 0
        %2003 = vmatpush1.bf16.msra.mxu0 %v1855
        %2004 = vmatprep.subr.bf16.mxu0 0
        %2005 = vmatpush1.bf16.msra.mxu0 %v1856
        %2006 = vmatprep.subr.bf16.mxu0 0
        %2007 = vmatpush1.bf16.msra.mxu0 %v1857
        %2008 = vmatprep.subr.bf16.mxu0 0
        %2009 = vmatpush1.bf16.msra.mxu0 %v1858
        %2010 = vmatprep.subr.bf16.mxu0 0
        %2011 = vmatpush1.bf16.msra.mxu0 %v1859
        %2012 = vmatprep.subr.bf16.mxu0 0
        %2013 = vmatpush1.bf16.msra.mxu0 %v1860
        %2014 = vmatprep.subr.bf16.mxu0 0
        %2015 = vmatpush1.bf16.msra.mxu0 %v1861
        %2016 = vmatprep.subr.bf16.mxu0 0
        %2017 = vmatpush1.bf16.msra.mxu0 %v1862
        %2018 = vmatprep.subr.bf16.mxu0 0
        %2019 = vmatpush1.bf16.msra.mxu0 %v1863
        %2020 = vmatprep.subr.bf16.mxu0 0
        %2021 = vmatpush1.bf16.msra.mxu0 %v1864
        %2022 = vmatprep.subr.bf16.mxu0 0
        %2023 = vmatpush1.bf16.msra.mxu0 %v1865
        %2024 = vmatprep.subr.bf16.mxu0 0
        %2025 = vmatpush1.bf16.msra.mxu0 %v1866
        %2026 = vmatprep.subr.bf16.mxu0 0
        %2027 = vmatpush1.bf16.msra.mxu0 %v1867
        %2028 = vmatprep.mubr.bf16.mxu0 %v1201
        %2029 = vmatmul.mubr.bf16.gmra.mrb[0].mxu0 %v1184
        %v2030 = vpop.f32.mrb[0].mxu0
        %v2031 = vadd.f32 %v1171, %v2030
        %v2032 = vpop.f32.mrb[0].mxu0
        %v2033 = vpop.f32.mrb[0].mxu0
        %v2034 = vadd.f32 %v1171, %v2033
        %v2035 = vpop.f32.mrb[0].mxu0
        %2036 = vmatprep.mubr.bf16.mxu0 %v1295
        %2037 = vmatmul.mubr.bf16.gmra.mrb[0].mxu0 %v1321
        %v2038 = vpop.f32.mrb[0].mxu0
        %v2039 = vadd.f32 %v1171, %v2038
        %v2040 = vpop.f32.mrb[0].mxu0
        %v2041 = vpop.f32.mrb[0].mxu0
        %v2042 = vadd.f32 %v1171, %v2041
        %v2043 = vpop.f32.mrb[0].mxu0
        %2044 = vmatprep.mubr.bf16.mxu0 %v1375
        %2045 = vmatmul.mubr.bf16.gmra.mrb[0].mxu0 %v1393
        %v2046 = vpop.f32.mrb[0].mxu0
        %v2047 = vadd.f32 %v1171, %v2046
        %v2048 = vpop.f32.mrb[0].mxu0
        %v2049 = vpop.f32.mrb[0].mxu0
        %v2050 = vadd.f32 %v1171, %v2049
        %v2051 = vpop.f32.mrb[0].mxu0
        %2052 = vmatprep.mubr.bf16.mxu0 %v1474
        %2053 = vmatmul.mubr.bf16.gmra.mrb[0].mxu0 %v1465
        %v2054 = vpop.f32.mrb[0].mxu0
        %v2055 = vadd.f32 %v1171, %v2054
        %v2056 = vpop.f32.mrb[0].mxu0
        %v2057 = vpop.f32.mrb[0].mxu0
        %v2058 = vadd.f32 %v1171, %v2057
        %v2059 = vpop.f32.mrb[0].mxu0
        %2060 = vdwg.mxu0
        %2061 = vmatprep.subr.bf16.mxu0 0
        %2062 = vmatpush1.bf16.msra.mxu0 %v1868
        %2063 = vmatprep.subr.bf16.mxu0 0
        %2064 = vmatpush1.bf16.msra.mxu0 %v1869
        %2065 = vmatprep.subr.bf16.mxu0 0
        %2066 = vmatpush1.bf16.msra.mxu0 %v1870
        %2067 = vmatprep.subr.bf16.mxu0 0
        %2068 = vmatpush1.bf16.msra.mxu0 %v1871
        %2069 = vmatprep.subr.bf16.mxu0 0
        %2070 = vmatpush1.bf16.msra.mxu0 %v1872
        %2071 = vmatprep.subr.bf16.mxu0 0
        %2072 = vmatpush1.bf16.msra.mxu0 %v1873
        %2073 = vmatprep.subr.bf16.mxu0 0
        %2074 = vmatpush1.bf16.msra.mxu0 %v1874
        %2075 = vmatprep.subr.bf16.mxu0 0
        %2076 = vmatpush1.bf16.msra.mxu0 %v1875
        %2077 = vmatprep.subr.bf16.mxu0 0
        %2078 = vmatpush1.bf16.msra.mxu0 %v1876
        %2079 = vmatprep.subr.bf16.mxu0 0
        %2080 = vmatpush1.bf16.msra.mxu0 %v1877
        %2081 = vmatprep.subr.bf16.mxu0 0
        %2082 = vmatpush1.bf16.msra.mxu0 %v1878
        %2083 = vmatprep.subr.bf16.mxu0 0
        %2084 = vmatpush1.bf16.msra.mxu0 %v1879
        %2085 = vmatprep.subr.bf16.mxu0 0
        %2086 = vmatpush1.bf16.msra.mxu0 %v1880
        %2087 = vmatprep.subr.bf16.mxu0 0
        %2088 = vmatpush1.bf16.msra.mxu0 %v1881
        %2089 = vmatprep.subr.bf16.mxu0 0
        %2090 = vmatpush1.bf16.msra.mxu0 %v1882
        %2091 = vmatprep.subr.bf16.mxu0 0
        %2092 = vmatpush1.bf16.msra.mxu0 %v1883
        %2093 = vmatprep.mubr.bf16.mxu0 %v1235
        %2094 = vmatmul.mubr.bf16.gmra.mrb[0].mxu0 %v1218
        %v2095 = vpop.f32.mrb[0].mxu0
        %v2096 = vadd.f32 %v2031, %v2095
        %v2097 = vpop.f32.mrb[0].mxu0
        %v2098 = vpop.f32.mrb[0].mxu0
        %v2099 = vadd.f32 %v2034, %v2098
        %v2100 = vpop.f32.mrb[0].mxu0
        %2101 = vmatprep.mubr.bf16.mxu0 %v1339
        %2102 = vmatmul.mubr.bf16.gmra.mrb[0].mxu0 %v1330
        %v2103 = vpop.f32.mrb[0].mxu0
        %v2104 = vadd.f32 %v2039, %v2103
        %v2105 = vpop.f32.mrb[0].mxu0
        %v2106 = vpop.f32.mrb[0].mxu0
        %v2107 = vadd.f32 %v2042, %v2106
        %v2108 = vpop.f32.mrb[0].mxu0
        %2109 = vmatprep.mubr.bf16.mxu0 %v1411
        %2110 = vmatmul.mubr.bf16.gmra.mrb[0].mxu0 %v1402
        %v2111 = vpop.f32.mrb[0].mxu0
        %v2112 = vadd.f32 %v2047, %v2111
        %v2113 = vpop.f32.mrb[0].mxu0
        %v2114 = vpop.f32.mrb[0].mxu0
        %v2115 = vadd.f32 %v2050, %v2114
        %v2116 = vpop.f32.mrb[0].mxu0
        %2117 = vmatprep.mubr.bf16.mxu0 %v1492
        %2118 = vmatmul.mubr.bf16.gmra.mrb[0].mxu0 %v1483
        %v2119 = vpop.f32.mrb[0].mxu0
        %v2120 = vadd.f32 %v2055, %v2119
        %v2121 = vpop.f32.mrb[0].mxu0
        %v2122 = vpop.f32.mrb[0].mxu0
        %v2123 = vadd.f32 %v2058, %v2122
        %v2124 = vpop.f32.mrb[0].mxu0
        %2125 = vdwg.mxu0
        %2126 = vmatprep.subr.bf16.mxu0 0
        %2127 = vmatpush1.bf16.msra.mxu0 %v1884
        %2128 = vmatprep.subr.bf16.mxu0 0
        %2129 = vmatpush1.bf16.msra.mxu0 %v1885
        %2130 = vmatprep.subr.bf16.mxu0 0
        %2131 = vmatpush1.bf16.msra.mxu0 %v1886
        %2132 = vmatprep.subr.bf16.mxu0 0
        %2133 = vmatpush1.bf16.msra.mxu0 %v1887
        %2134 = vmatprep.subr.bf16.mxu0 0
        %2135 = vmatpush1.bf16.msra.mxu0 %v1888
        %2136 = vmatprep.subr.bf16.mxu0 0
        %2137 = vmatpush1.bf16.msra.mxu0 %v1889
        %2138 = vmatprep.subr.bf16.mxu0 0
        %2139 = vmatpush1.bf16.msra.mxu0 %v1890
        %2140 = vmatprep.subr.bf16.mxu0 0
        %2141 = vmatpush1.bf16.msra.mxu0 %v1891
        %2142 = vmatprep.subr.bf16.mxu0 0
        %2143 = vmatpush1.bf16.msra.mxu0 %v1892
        %2144 = vmatprep.subr.bf16.mxu0 0
        %2145 = vmatpush1.bf16.msra.mxu0 %v1893
        %2146 = vmatprep.subr.bf16.mxu0 0
        %2147 = vmatpush1.bf16.msra.mxu0 %v1894
        %2148 = vmatprep.subr.bf16.mxu0 0
        %2149 = vmatpush1.bf16.msra.mxu0 %v1895
        %2150 = vmatprep.subr.bf16.mxu0 0
        %2151 = vmatpush1.bf16.msra.mxu0 %v1896
        %2152 = vmatprep.subr.bf16.mxu0 0
        %2153 = vmatpush1.bf16.msra.mxu0 %v1897
        %2154 = vmatprep.subr.bf16.mxu0 0
        %2155 = vmatpush1.bf16.msra.mxu0 %v1898
        %2156 = vmatprep.subr.bf16.mxu0 0
        %2157 = vmatpush1.bf16.msra.mxu0 %v1899
        %2158 = vmatprep.mubr.bf16.mxu0 %v1269
        %2159 = vmatmul.mubr.bf16.gmra.mrb[0].mxu0 %v1252
        %v2160 = vpop.f32.mrb[0].mxu0
        %v2161 = vadd.f32 %v2096, %v2160
        %v2162 = vpop.f32.mrb[0].mxu0
        %v2163 = vpop.f32.mrb[0].mxu0
        %v2164 = vadd.f32 %v2099, %v2163
        %v2165 = vpop.f32.mrb[0].mxu0
        %2166 = vmatprep.mubr.bf16.mxu0 %v1357
        %2167 = vmatmul.mubr.bf16.gmra.mrb[0].mxu0 %v1348
        %v2168 = vpop.f32.mrb[0].mxu0
        %v2169 = vadd.f32 %v2104, %v2168
        %v2170 = vpop.f32.mrb[0].mxu0
        %v2171 = vpop.f32.mrb[0].mxu0
        %v2172 = vadd.f32 %v2107, %v2171
        %v2173 = vpop.f32.mrb[0].mxu0
        %2174 = vmatprep.mubr.bf16.mxu0 %v1429
        %2175 = vmatmul.mubr.bf16.gmra.mrb[0].mxu0 %v1420
        %v2176 = vpop.f32.mrb[0].mxu0
        %v2177 = vadd.f32 %v2112, %v2176
        %v2178 = vpop.f32.mrb[0].mxu0
        %v2179 = vpop.f32.mrb[0].mxu0
        %v2180 = vadd.f32 %v2115, %v2179
        %v2181 = vpop.f32.mrb[0].mxu0
        %2182 = vmatprep.mubr.bf16.mxu0 %v1510
        %2183 = vmatmul.mubr.bf16.gmra.mrb[0].mxu0 %v1501
        %v2184 = vpop.f32.mrb[0].mxu0
        %v2185 = vadd.f32 %v2120, %v2184
        %v2186 = vpop.f32.mrb[0].mxu0
        %v2187 = vpop.f32.mrb[0].mxu0
        %v2188 = vadd.f32 %v2123, %v2187
        %v2189 = vpop.f32.mrb[0].mxu0
        %2190 = vdwg.mxu0
        %2191 = vmatprep.subr.bf16.mxu0 0
        %2192 = vmatpush1.bf16.msra.mxu0 %v1900
        %2193 = vmatprep.subr.bf16.mxu0 0
        %2194 = vmatpush1.bf16.msra.mxu0 %v1901
        %2195 = vmatprep.subr.bf16.mxu0 0
        %2196 = vmatpush1.bf16.msra.mxu0 %v1902
        %2197 = vmatprep.subr.bf16.mxu0 0
        %2198 = vmatpush1.bf16.msra.mxu0 %v1903
        %2199 = vmatprep.subr.bf16.mxu0 0
        %2200 = vmatpush1.bf16.msra.mxu0 %v1904
        %2201 = vmatprep.subr.bf16.mxu0 0
        %2202 = vmatpush1.bf16.msra.mxu0 %v1905
        %2203 = vmatprep.subr.bf16.mxu0 0
        %2204 = vmatpush1.bf16.msra.mxu0 %v1906
        %2205 = vmatprep.subr.bf16.mxu0 0
        %2206 = vmatpush1.bf16.msra.mxu0 %v1907
        %2207 = vmatprep.subr.bf16.mxu0 0
        %2208 = vmatpush1.bf16.msra.mxu0 %v1908
        %2209 = vmatprep.subr.bf16.mxu0 0
        %2210 = vmatpush1.bf16.msra.mxu0 %v1909
        %2211 = vmatprep.subr.bf16.mxu0 0
        %2212 = vmatpush1.bf16.msra.mxu0 %v1910
        %2213 = vmatprep.subr.bf16.mxu0 0
        %2214 = vmatpush1.bf16.msra.mxu0 %v1911
        %2215 = vmatprep.subr.bf16.mxu0 0
        %2216 = vmatpush1.bf16.msra.mxu0 %v1912
        %2217 = vmatprep.subr.bf16.mxu0 0
        %2218 = vmatpush1.bf16.msra.mxu0 %v1913
        %2219 = vmatprep.subr.bf16.mxu0 0
        %2220 = vmatpush1.bf16.msra.mxu0 %v1914
        %2221 = vmatprep.subr.bf16.mxu0 0
        %2222 = vmatpush1.bf16.msra.mxu0 %v1915
        %2223 = vmatprep.mubr.bf16.mxu0 %v1295
        %2224 = vmatmul.mubr.bf16.gmra.mrb[0].mxu0 %v1286
        %v2225 = vpop.f32.mrb[0].mxu0
        %v2226 = vadd.f32 %v2161, %v2225
        %v2227 = vpop.f32.mrb[0].mxu0
        %v2228 = vpop.f32.mrb[0].mxu0
        %v2229 = vadd.f32 %v2164, %v2228
        %v2230 = vpop.f32.mrb[0].mxu0
        %2231 = vmatprep.mubr.bf16.mxu0 %v1375
        %2232 = vmatmul.mubr.bf16.gmra.mrb[0].mxu0 %v1366
        %v2233 = vpop.f32.mrb[0].mxu0
        %v2234 = vadd.f32 %v2169, %v2233
        %v2235 = vpop.f32.mrb[0].mxu0
        %v2236 = vpop.f32.mrb[0].mxu0
        %v2237 = vadd.f32 %v2172, %v2236
        %v2238 = vpop.f32.mrb[0].mxu0
        %2239 = vmatprep.mubr.bf16.mxu0 %v1447
        %2240 = vmatmul.mubr.bf16.gmra.mrb[0].mxu0 %v1438
        %v2241 = vpop.f32.mrb[0].mxu0
        %v2242 = vadd.f32 %v2177, %v2241
        %v2243 = vpop.f32.mrb[0].mxu0
        %v2244 = vpop.f32.mrb[0].mxu0
        %v2245 = vadd.f32 %v2180, %v2244
        %v2246 = vpop.f32.mrb[0].mxu0
        %2247 = vmatprep.mubr.bf16.mxu0 %v1520
        %2248 = vmatmul.mubr.bf16.gmra.mrb[0].mxu0 %v1511
        %v2249 = vpop.f32.mrb[0].mxu0
        %v2250 = vadd.f32 %v2185, %v2249
        %v2251 = vpop.f32.mrb[0].mxu0
        %v2252 = vpop.f32.mrb[0].mxu0
        %v2253 = vadd.f32 %v2188, %v2252
        %v2254 = vpop.f32.mrb[0].mxu0
        %2255 = vdwg.mxu0
        %2256 = vmatprep.subr.bf16.mxu0 0
        %2257 = vmatpush1.bf16.msra.mxu0 %v1916
        %2258 = vmatprep.subr.bf16.mxu0 0
        %2259 = vmatpush1.bf16.msra.mxu0 %v1917
        %2260 = vmatprep.subr.bf16.mxu0 0
        %2261 = vmatpush1.bf16.msra.mxu0 %v1918
        %2262 = vmatprep.subr.bf16.mxu0 0
        %2263 = vmatpush1.bf16.msra.mxu0 %v1919
        %2264 = vmatprep.subr.bf16.mxu0 0
        %2265 = vmatpush1.bf16.msra.mxu0 %v1920
        %2266 = vmatprep.subr.bf16.mxu0 0
        %2267 = vmatpush1.bf16.msra.mxu0 %v1921
        %2268 = vmatprep.subr.bf16.mxu0 0
        %2269 = vmatpush1.bf16.msra.mxu0 %v1922
        %2270 = vmatprep.subr.bf16.mxu0 0
        %2271 = vmatpush1.bf16.msra.mxu0 %v1923
        %2272 = vmatprep.subr.bf16.mxu0 0
        %2273 = vmatpush1.bf16.msra.mxu0 0
        %2274 = vmatprep.subr.bf16.mxu0 0
        %2275 = vmatpush1.bf16.msra.mxu0 0
        %2276 = vmatprep.subr.bf16.mxu0 0
        %2277 = vmatpush1.bf16.msra.mxu0 0
        %2278 = vmatprep.subr.bf16.mxu0 0
        %2279 = vmatpush1.bf16.msra.mxu0 0
        %2280 = vmatprep.subr.bf16.mxu0 0
        %2281 = vmatpush1.bf16.msra.mxu0 0
        %2282 = vmatprep.subr.bf16.mxu0 0
        %2283 = vmatpush1.bf16.msra.mxu0 0
        %2284 = vmatprep.subr.bf16.mxu0 0
        %2285 = vmatpush1.bf16.msra.mxu0 0
        %2286 = vmatprep.subr.bf16.mxu0 0
        %2287 = vmatpush1.bf16.msra.mxu0 0
        %2288 = vmatprep.mubr.bf16.mxu0 0
        %2289 = vmatmul.mubr.bf16.gmra.mrb[0].mxu0 %v1312
        %v2290 = vpop.f32.mrb[0].mxu0
        %v2291 = vadd.f32 %v2226, %v2290
        %v2292 = vpop.f32.mrb[0].mxu0
        %v2293 = vpop.f32.mrb[0].mxu0
        %v2294 = vadd.f32 %v2229, %v2293
        %v2295 = vpop.f32.mrb[0].mxu0
        %2296 = vmatprep.mubr.bf16.mxu0 0
        %2297 = vmatmul.mubr.bf16.gmra.mrb[0].mxu0 %v1384
        %v2298 = vpop.f32.mrb[0].mxu0
        %v2299 = vadd.f32 %v2234, %v2298
        %v2300 = vpop.f32.mrb[0].mxu0
        %v2301 = vpop.f32.mrb[0].mxu0
        %v2302 = vadd.f32 %v2237, %v2301
        %v2303 = vpop.f32.mrb[0].mxu0
        %2304 = vmatprep.mubr.bf16.mxu0 0
        %2305 = vmatmul.mubr.bf16.gmra.mrb[0].mxu0 %v1456
        %v2306 = vpop.f32.mrb[0].mxu0
        %v2307 = vadd.f32 %v2242, %v2306
        %v2308 = vpop.f32.mrb[0].mxu0
        %v2309 = vpop.f32.mrb[0].mxu0
        %v2310 = vadd.f32 %v2245, %v2309
        %v2311 = vpop.f32.mrb[0].mxu0
        %2312 = vmatprep.mubr.bf16.mxu0 0
        %2313 = vmatmul.mubr.bf16.gmra.mrb[0].mxu0 %v1529
        %v2314 = vpop.f32.mrb[0].mxu0
        %v2315 = vadd.f32 %v2250, %v2314
        %v2316 = vpop.f32.mrb[0].mxu0
        %v2317 = vpop.f32.mrb[0].mxu0
        %v2318 = vadd.f32 %v2253, %v2317
        %v2319 = vpop.f32.mrb[0].mxu0
        %2320 = vdwg.mxu0
        %v2321 = vmax.f32 %v2291, 0.0
        %v2322 = vmax.f32 %v2294, 0.0
        %v2323 = vmax.f32 %v2299, 0.0
        %v2324 = vmax.f32 %v2302, 0.0
        %v2325 = vmax.f32 %v2307, 0.0
        %v2326 = vmax.f32 %v2310, 0.0
        %v2327 = vmax.f32 %v2315, 0.0
        %v2328 = vmax.f32 %v2318, 0.0
        %v2329 = vpack.c.bf16 %v2322, %v2321
        %v2330 = vpack.c.bf16 %v2324, %v2323
        %v2331 = vpack.c.bf16 %v2326, %v2325
        %v2332 = vpack.c.bf16 %v2328, %v2327
        %v2333 = vld [vmem:[#allocation8] sm:$0xf]
        %v2334 = vld [vmem:[#allocation8 + $0x4] sm:$0xf]
        %v2335 = vld [vmem:[#allocation8 + $0x8] sm:$0xf]
        %v2336 = vld [vmem:[#allocation8 + $0xc] sm:$0xf]
        %v2337 = vld [vmem:[#allocation8 + $0x10] sm:$0xf]
        %v2338 = vld [vmem:[#allocation8 + $0x14] sm:$0xf]
        %v2339 = vld [vmem:[#allocation8 + $0x18] sm:$0xf]
        %v2340 = vld [vmem:[#allocation8 + $0x1c] sm:$0xf]
        %v2341 = vld [vmem:[#allocation8 + $0x20] sm:$0xf]
        %v2342 = vld [vmem:[#allocation8 + $0x24] sm:$0xf]
        %v2343 = vld [vmem:[#allocation8 + $0x28] sm:$0xf]
        %v2344 = vld [vmem:[#allocation8 + $0x2c] sm:$0xf]
        %v2345 = vld [vmem:[#allocation8 + $0x30] sm:$0xf]
        %v2346 = vld [vmem:[#allocation8 + $0x34] sm:$0xf]
        %v2347 = vld [vmem:[#allocation8 + $0x38] sm:$0xf]
        %v2348 = vld [vmem:[#allocation8 + $0x3c] sm:$0xf]
        %v2349 = vld [vmem:[#allocation10] sm:$0xf]
        %v2350 = vld [vmem:[#allocation10 + $0x4] sm:$0xf]
        %v2351 = vld [vmem:[#allocation10 + $0x8] sm:$0xf]
        %v2352 = vld [vmem:[#allocation10 + $0xc] sm:$0xf]
        %v2353 = vld [vmem:[#allocation10 + $0x10] sm:$0xf]
        %v2354 = vld [vmem:[#allocation10 + $0x14] sm:$0xf]
        %v2355 = vld [vmem:[#allocation10 + $0x18] sm:$0xf]
        %v2356 = vld [vmem:[#allocation10 + $0x1c] sm:$0xf]
        %v2357 = vld [vmem:[#allocation10 + $0x20] sm:$0xf]
        %v2358 = vld [vmem:[#allocation10 + $0x24] sm:$0xf]
        %v2359 = vld [vmem:[#allocation10 + $0x28] sm:$0xf]
        %v2360 = vld [vmem:[#allocation10 + $0x2c] sm:$0xf]
        %v2361 = vld [vmem:[#allocation10 + $0x30] sm:$0xf]
        %v2362 = vld [vmem:[#allocation10 + $0x34] sm:$0xf]
        %v2363 = vld [vmem:[#allocation10 + $0x38] sm:$0xf]
        %v2364 = vld [vmem:[#allocation10 + $0x3c] sm:$0xf]
        %v2381 = vunpack.c.l.b16 %v2349
        %v2382 = vunpack.c.l.b16 %v2350
        %v2383 = vunpack.c.l.b16 %v2351
        %v2384 = vunpack.c.l.b16 %v2352
        %v2385 = vunpack.c.l.b16 %v2353
        %v2386 = vunpack.c.l.b16 %v2354
        %v2387 = vunpack.c.l.b16 %v2355
        %v2388 = vunpack.c.l.b16 %v2356
        %v2389 = vunpack.c.l.b16 %v2357
        %v2390 = vunpack.c.l.b16 %v2358
        %v2391 = vunpack.c.l.b16 %v2359
        %v2392 = vunpack.c.l.b16 %v2360
        %v2393 = vunpack.c.l.b16 %v2361
        %v2394 = vunpack.c.l.b16 %v2362
        %v2395 = vunpack.c.l.b16 %v2363
        %v2396 = vunpack.c.l.b16 %v2364
        %v2397 = vpack.c.b16 %v2382, %v2381
        %v2398 = vpack.c.b16 %v2384, %v2383
        %v2399 = vpack.c.b16 %v2386, %v2385
        %v2400 = vpack.c.b16 %v2388, %v2387
        %v2401 = vpack.c.b16 %v2390, %v2389
        %v2402 = vpack.c.b16 %v2392, %v2391
        %v2403 = vpack.c.b16 %v2394, %v2393
        %v2404 = vpack.c.b16 %v2396, %v2395
        %2413 = vmatprep.subr.bf16.mxu0 0
        %2414 = vmatpush1.bf16.msra.mxu0 %v2397
        %2415 = vmatprep.subr.bf16.mxu0 0
        %2416 = vmatpush1.bf16.msra.mxu0 %v2398
        %2417 = vmatprep.subr.bf16.mxu0 0
        %2418 = vmatpush1.bf16.msra.mxu0 %v2399
        %2419 = vmatprep.subr.bf16.mxu0 0
        %2420 = vmatpush1.bf16.msra.mxu0 %v2400
        %2421 = vmatprep.subr.bf16.mxu0 0
        %2422 = vmatpush1.bf16.msra.mxu0 %v2401
        %2423 = vmatprep.subr.bf16.mxu0 0
        %2424 = vmatpush1.bf16.msra.mxu0 %v2402
        %2425 = vmatprep.subr.bf16.mxu0 0
        %2426 = vmatpush1.bf16.msra.mxu0 %v2403
        %2427 = vmatprep.subr.bf16.mxu0 0
        %2428 = vmatpush1.bf16.msra.mxu0 %v2404
        %2429 = vmatprep.subr.bf16.mxu0 0
        %2430 = vmatpush1.bf16.msra.mxu0 0
        %2431 = vmatprep.subr.bf16.mxu0 0
        %2432 = vmatpush1.bf16.msra.mxu0 0
        %2433 = vmatprep.subr.bf16.mxu0 0
        %2434 = vmatpush1.bf16.msra.mxu0 0
        %2435 = vmatprep.subr.bf16.mxu0 0
        %2436 = vmatpush1.bf16.msra.mxu0 0
        %2437 = vmatprep.subr.bf16.mxu0 0
        %2438 = vmatpush1.bf16.msra.mxu0 0
        %2439 = vmatprep.subr.bf16.mxu0 0
        %2440 = vmatpush1.bf16.msra.mxu0 0
        %2441 = vmatprep.subr.bf16.mxu0 0
        %2442 = vmatpush1.bf16.msra.mxu0 0
        %2443 = vmatprep.subr.bf16.mxu0 0
        %2444 = vmatpush1.bf16.msra.mxu0 0
        %2445 = vmatprep.mubr.bf16.mxu0 0
        %2446 = vmatmul.mubr.bf16.gmra.mrb[0].mxu0 %v432
        %v2447 = vpop.f32.mrb[0].mxu0
        %v2448 = vadd.f32 0.0, %v2447
        %v2449 = vpop.f32.mrb[0].mxu0
        %v2450 = vpop.f32.mrb[0].mxu0
        %v2451 = vadd.f32 0.0, %v2450
        %v2452 = vpop.f32.mrb[0].mxu0
        %2453 = vmatprep.mubr.bf16.mxu0 0
        %2454 = vmatmul.mubr.bf16.gmra.mrb[0].mxu0 %v433
        %v2455 = vpop.f32.mrb[0].mxu0
        %v2456 = vadd.f32 0.0, %v2455
        %v2457 = vpop.f32.mrb[0].mxu0
        %v2458 = vpop.f32.mrb[0].mxu0
        %v2459 = vadd.f32 0.0, %v2458
        %v2460 = vpop.f32.mrb[0].mxu0
        %2461 = vmatprep.mubr.bf16.mxu0 0
        %2462 = vmatmul.mubr.bf16.gmra.mrb[0].mxu0 %v434
        %v2463 = vpop.f32.mrb[0].mxu0
        %v2464 = vadd.f32 0.0, %v2463
        %v2465 = vpop.f32.mrb[0].mxu0
        %v2466 = vpop.f32.mrb[0].mxu0
        %v2467 = vadd.f32 0.0, %v2466
        %v2468 = vpop.f32.mrb[0].mxu0
        %2469 = vmatprep.mubr.bf16.mxu0 0
        %2470 = vmatmul.mubr.bf16.gmra.mrb[0].mxu0 %v435
        %v2471 = vpop.f32.mrb[0].mxu0
        %v2472 = vadd.f32 0.0, %v2471
        %v2473 = vpop.f32.mrb[0].mxu0
        %v2474 = vpop.f32.mrb[0].mxu0
        %v2475 = vadd.f32 0.0, %v2474
        %v2476 = vpop.f32.mrb[0].mxu0
        %2477 = vdwg.mxu0
        %v2494 = vunpack.c.l.b16 %v2333
        %v2495 = vunpack.c.l.b16 %v2334
        %v2496 = vunpack.c.l.b16 %v2335
        %v2497 = vunpack.c.l.b16 %v2336
        %v2498 = vunpack.c.l.b16 %v2337
        %v2499 = vunpack.c.l.b16 %v2338
        %v2500 = vunpack.c.l.b16 %v2339
        %v2501 = vunpack.c.l.b16 %v2340
        %v2502 = vunpack.c.l.b16 %v2341
        %v2503 = vunpack.c.l.b16 %v2342
        %v2504 = vunpack.c.l.b16 %v2343
        %v2505 = vunpack.c.l.b16 %v2344
        %v2506 = vunpack.c.l.b16 %v2345
        %v2507 = vunpack.c.l.b16 %v2346
        %v2508 = vunpack.c.l.b16 %v2347
        %v2509 = vunpack.c.l.b16 %v2348
        %v2510 = vpack.c.b16 %v2495, %v2494
        %v2511 = vpack.c.b16 %v2497, %v2496
        %v2512 = vpack.c.b16 %v2499, %v2498
        %v2513 = vpack.c.b16 %v2501, %v2500
        %v2514 = vpack.c.b16 %v2503, %v2502
        %v2515 = vpack.c.b16 %v2505, %v2504
        %v2516 = vpack.c.b16 %v2507, %v2506
        %v2517 = vpack.c.b16 %v2509, %v2508
        %2526 = vmatprep.subr.bf16.mxu0 0
        %2527 = vmatpush1.bf16.msra.mxu0 %v2510
        %2528 = vmatprep.subr.bf16.mxu0 0
        %2529 = vmatpush1.bf16.msra.mxu0 %v2511
        %2530 = vmatprep.subr.bf16.mxu0 0
        %2531 = vmatpush1.bf16.msra.mxu0 %v2512
        %2532 = vmatprep.subr.bf16.mxu0 0
        %2533 = vmatpush1.bf16.msra.mxu0 %v2513
        %2534 = vmatprep.subr.bf16.mxu0 0
        %2535 = vmatpush1.bf16.msra.mxu0 %v2514
        %2536 = vmatprep.subr.bf16.mxu0 0
        %2537 = vmatpush1.bf16.msra.mxu0 %v2515
        %2538 = vmatprep.subr.bf16.mxu0 0
        %2539 = vmatpush1.bf16.msra.mxu0 %v2516
        %2540 = vmatprep.subr.bf16.mxu0 0
        %2541 = vmatpush1.bf16.msra.mxu0 %v2517
        %2542 = vmatprep.subr.bf16.mxu0 0
        %2543 = vmatpush1.bf16.msra.mxu0 0
        %2544 = vmatprep.subr.bf16.mxu0 0
        %2545 = vmatpush1.bf16.msra.mxu0 0
        %2546 = vmatprep.subr.bf16.mxu0 0
        %2547 = vmatpush1.bf16.msra.mxu0 0
        %2548 = vmatprep.subr.bf16.mxu0 0
        %2549 = vmatpush1.bf16.msra.mxu0 0
        %2550 = vmatprep.subr.bf16.mxu0 0
        %2551 = vmatpush1.bf16.msra.mxu0 0
        %2552 = vmatprep.subr.bf16.mxu0 0
        %2553 = vmatpush1.bf16.msra.mxu0 0
        %2554 = vmatprep.subr.bf16.mxu0 0
        %2555 = vmatpush1.bf16.msra.mxu0 0
        %2556 = vmatprep.subr.bf16.mxu0 0
        %2557 = vmatpush1.bf16.msra.mxu0 0
        %2558 = vmatprep.mubr.bf16.mxu0 0
        %2559 = vmatmul.mubr.bf16.gmra.mrb[0].mxu0 %v2329
        %v2560 = vpop.f32.mrb[0].mxu0
        %v2561 = vadd.f32 %v2448, %v2560
        %v2562 = vpop.f32.mrb[0].mxu0
        %v2563 = vpop.f32.mrb[0].mxu0
        %v2564 = vadd.f32 %v2451, %v2563
        %v2565 = vpop.f32.mrb[0].mxu0
        %2566 = vmatprep.mubr.bf16.mxu0 0
        %2567 = vmatmul.mubr.bf16.gmra.mrb[0].mxu0 %v2330
        %v2568 = vpop.f32.mrb[0].mxu0
        %v2569 = vadd.f32 %v2456, %v2568
        %v2570 = vpop.f32.mrb[0].mxu0
        %v2571 = vpop.f32.mrb[0].mxu0
        %v2572 = vadd.f32 %v2459, %v2571
        %v2573 = vpop.f32.mrb[0].mxu0
        %2574 = vmatprep.mubr.bf16.mxu0 0
        %2575 = vmatmul.mubr.bf16.gmra.mrb[0].mxu0 %v2331
        %v2576 = vpop.f32.mrb[0].mxu0
        %v2577 = vadd.f32 %v2464, %v2576
        %v2578 = vpop.f32.mrb[0].mxu0
        %v2579 = vpop.f32.mrb[0].mxu0
        %v2580 = vadd.f32 %v2467, %v2579
        %v2581 = vpop.f32.mrb[0].mxu0
        %2582 = vmatprep.mubr.bf16.mxu0 0
        %2583 = vmatmul.mubr.bf16.gmra.mrb[0].mxu0 %v2332
        %v2584 = vpop.f32.mrb[0].mxu0
        %v2585 = vadd.f32 %v2472, %v2584
        %v2586 = vpop.f32.mrb[0].mxu0
        %v2587 = vpop.f32.mrb[0].mxu0
        %v2588 = vadd.f32 %v2475, %v2587
        %v2589 = vpop.f32.mrb[0].mxu0
        %2590 = vdwg.mxu0
        %v2591 = vld [vmem:[%s7] sm:$0x1]
        %v2593 = vlaneseq
        %v2594 = vshrl.u32 %v2593, 7
        %v2595 = vsub.s32 0, %v2594
        %v2596 = vrot.slane %v2591, %v2595
        %v2598 = vadd.f32 %v2561, %v2596
        %v2599 = vadd.f32 %v2564, %v2596
        %v2600 = vadd.f32 %v2569, %v2596
        %v2601 = vadd.f32 %v2572, %v2596
        %v2602 = vadd.f32 %v2577, %v2596
        %v2603 = vadd.f32 %v2580, %v2596
        %v2604 = vadd.f32 %v2585, %v2596
        %v2605 = vadd.f32 %v2588, %v2596
        %v2606 = vmax.f32 %v2598, 0.0
        %v2607 = vmax.f32 %v2599, 0.0
        %v2608 = vmax.f32 %v2600, 0.0
        %v2609 = vmax.f32 %v2601, 0.0
        %v2610 = vmax.f32 %v2602, 0.0
        %v2611 = vmax.f32 %v2603, 0.0
        %v2612 = vmax.f32 %v2604, 0.0
        %v2613 = vmax.f32 %v2605, 0.0
        %v2614 = vpack.c.bf16 %v2607, %v2606
        %v2615 = vpack.c.bf16 %v2609, %v2608
        %v2616 = vpack.c.bf16 %v2611, %v2610
        %v2617 = vpack.c.bf16 %v2613, %v2612
        %v2622 = vunpack.c.l.b16 %v2614
        %v2623 = vunpack.c.h.b16 %v2614
        %v2624 = vunpack.c.l.b16 %v2615
        %v2625 = vunpack.c.h.b16 %v2615
        %v2626 = vunpack.c.l.b16 %v2616
        %v2627 = vunpack.c.h.b16 %v2616
        %v2628 = vunpack.c.l.b16 %v2617
        %v2629 = vunpack.c.h.b16 %v2617
        %v2630 = vpack.c.b16 %v2622, %v2622
        %v2631 = vpack.c.b16 %v2623, %v2623
        %v2632 = vpack.c.b16 %v2624, %v2624
        %v2633 = vpack.c.b16 %v2625, %v2625
        %v2634 = vpack.c.b16 %v2626, %v2626
        %v2635 = vpack.c.b16 %v2627, %v2627
        %v2636 = vpack.c.b16 %v2628, %v2628
        %v2637 = vpack.c.b16 %v2629, %v2629
        %2646 = vst [vmem:[%s381] sm:$0xf] %v2630
        %2647 = vst [vmem:[%s381 + $0x4] sm:$0xf] %v2631
        %2648 = vst [vmem:[%s381 + $0x8] sm:$0xf] %v2632
        %2649 = vst [vmem:[%s381 + $0xc] sm:$0xf] %v2633
        %2650 = vst [vmem:[%s381 + $0x10] sm:$0xf] %v2634
        %2651 = vst [vmem:[%s381 + $0x14] sm:$0xf] %v2635
        %2652 = vst [vmem:[%s381 + $0x18] sm:$0xf] %v2636
        %2653 = vst [vmem:[%s381 + $0x1c] sm:$0xf] %v2637
        %s2654 = sand.u32 %s208, 1
        %s2655 = scalar_lea.sflag [#allocation4], %s2654
        %s2656 = sand.u32 %s208, 1
        %s2657 = smul.addr %s2656, 32
        %s2658 = scalar_lea.vmem [#allocation11], %s2657
        // Predicated region
        $region73: #{tpu_custom_call.1} parent=51 // pred_check
          %p2659 = pneg %p218
        $region74: #{tpu_custom_call.1} parent=51 // pred_check_branch
          %2661 = sbr.rel (%p2659) target = $region76
        $region75: #{tpu_custom_call.1} parent=51 // pred_region
          %s2663 = ssub.s32 512, 512
          %2664 = vsyncadd %s2655, %s2663
          %s2665 = smul.addr %s27, 8
          %s2666 = smul.addr %s2665, 64
          %s2667 = scalar_lea.hbm %s8, %s2666
          %s2668 = sshll.u32 %s2658, 4
          %s2669 = int_to_ptr.vmem [resolvable:$true] %s2668
          %2674 = dma.vmem_to_hbm [thread:$0]  %s2669, 512, %s2667, %s2655, 64, 64, 4
        $region76: #{tpu_custom_call.1} parent=51 // pred_fallthru
          _
      $region52: #{tpu_custom_call.1} parent=5 // pred_fallthru
        _
      %p2675 = scmp.le.s32.totalorder 2, %s22
      // Predicated region
      $region77: #{tpu_custom_call.1} parent=5 // pred_check
        %p2676 = pneg %p2675
      $region78: #{tpu_custom_call.1} parent=5 // pred_check_branch
        %2678 = sbr.rel (%p2676) target = $region80
      $region79: #{tpu_custom_call.1} parent=5 // pred_region
        %s2679 = ssub.s32 %s22, 2
        // Predicated region
        $region81: #{tpu_custom_call.1} parent=79 // pred_check
          %p2680 = pneg %p224
        $region82: #{tpu_custom_call.1} parent=79 // pred_check_branch
          %2682 = sbr.rel (%p2680) target = $region84
        $region83: #{tpu_custom_call.1} parent=79 // pred_region
          %s2683 = sand.u32 %s209, 1
          %s2684 = scalar_lea.sflag [#allocation4], %s2683
          %s2685 = sand.u32 %s209, 1
          %s2686 = smul.addr %s2685, 32
          %s2687 = scalar_lea.vmem [#allocation11], %s2686
          %2688 = dma.done %s2684, 512
        $region84: #{tpu_custom_call.1} parent=79 // pred_fallthru
          _
      $region80: #{tpu_custom_call.1} parent=5 // pred_fallthru
        _
    $region6: #{tpu_custom_call.1} parent=1 // loop_footer
      %s26 = sadd.s32 1, %s22
    $region7: #{tpu_custom_call.1} parent=1 // loop_footer_branch
      %21 = sbr.rel target = $region3
    $region8: #{tpu_custom_call.1} parent=1 // loop_exit
      _
    %2689 = vsyncpa [#allocation3], 1
    %s2690 = scalar_lea.sflag [#allocation3], 1
    %2691 = vsyncpa %s2690, 1
    %2692 = vsyncpa [#allocation6], 1
    %2693 = vsyncpa [#allocation9], 1
    %2694 = vsyncpa [#allocation4], 1
    %s2695 = scalar_lea.sflag [#allocation4], 1
    %2696 = vsyncpa %s2695, 1

</llo_original>
